<compile_context>
chip_gen: v7x
topology: tpu7x:2x2x1
jax: 0.10.0
libtpu: 0.0.40
codegen_flags: <defaults>
</compile_context>

<pallas_src>
import functools

import jax
import jax.numpy as jnp
from jax import lax
from jax.experimental import pallas as pl
from jax.experimental.pallas import tpu as pltpu


def lstm_tagger_kernel(embeds_ref, wih_ref, whh_ref, b_ref, fcw_ref, fcb_ref,
                       out_ref, pre_ref, hall_ref, *, seq_len):
    """LSTM recurrence + FC + log_softmax for one sentence, all resident in VMEM.

    embeds_ref: (S_pad, E)   wih_ref: (E, 4H)   whh_ref: (H, 4H)   b_ref: (1, 4H)
    fcw_ref:   (H, T_pad)    fcb_ref: (1, T_pad)                   out_ref: (S_pad, T_pad)
    scratch:   pre_ref (S_pad, 4H) pre-computed input gates, hall_ref (S_pad, H) hidden states
    """
    s_pad, hidden = hall_ref.shape
    four_h = whh_ref.shape[-1]
    H = hidden

    # Hoisted input projection: one batched matmul instead of S separate M=1 pushes.
    pre_ref[...] = (jnp.dot(embeds_ref[...], wih_ref[...],
                            preferred_element_type=jnp.float32)
                    + b_ref[...])                                   # (S_pad, 4H)

    # Only the padded tail rows need zeroing; the loop overwrites rows [0, seq_len).
    if s_pad > seq_len:
        hall_ref[pl.ds(seq_len, s_pad - seq_len), :] = jnp.zeros(
            (s_pad - seq_len, H), jnp.float32)

    # Keep the recurrent weights resident in vregs across the whole loop.
    whh = whh_ref[...]                                              # (H, 4H)

    # One EUP pass per step for all four gates:
    #   y   = tanh(scale * gates)  with scale = 0.5 on i/f/o lanes, 1.0 on g lanes
    #   act = scale * y + bias     turns i/f/o lanes into sigmoid(x), leaves g = tanh(x)
    lane = lax.broadcasted_iota(jnp.int32, (1, four_h), 1)
    is_g = (lane >= 2 * H) & (lane < 3 * H)
    gate_scale = jnp.where(is_g, jnp.float32(1.0), jnp.float32(0.5))  # (1, 4H)
    gate_bias = jnp.where(is_g, jnp.float32(0.0), jnp.float32(0.5))   # (1, 4H)

    def step(t, carry):
        h, c = carry                                                # (1, H), (1, H) in vregs
        gates = pre_ref[pl.ds(t, 1), :] + jnp.dot(
            h, whh, preferred_element_type=jnp.float32)             # (1, 4H)
        act = jnp.tanh(gates * gate_scale) * gate_scale + gate_bias
        # Static lane slices (PyTorch gate order: i, f, g, o).
        i = act[:, 0 * H:1 * H]
        f = act[:, 1 * H:2 * H]
        g = act[:, 2 * H:3 * H]
        o = act[:, 3 * H:4 * H]
        c_new = f * c + i * g
        h_new = o * jnp.tanh(c_new)
        # Lane-sparse (1, H) store -- off the recurrence-carried chain, deliberately left as is.
        hall_ref[pl.ds(t, 1), :] = h_new
        return (h_new, c_new)

    h0 = jnp.zeros((1, H), jnp.float32)
    c0 = jnp.zeros((1, H), jnp.float32)
    # Static trip count -> fully unroll so the LLO scheduler can interleave adjacent steps.
    lax.fori_loop(0, seq_len, step, (h0, c0), unroll=True)

    # fc projection + log_softmax, lane-dense (tag axis padded to 128 lanes).
    tag_space = (jnp.dot(hall_ref[...], fcw_ref[...],
                         preferred_element_type=jnp.float32)
                 + fcb_ref[...])                                    # (S_pad, T_pad)
    m = jnp.max(tag_space, axis=-1, keepdims=True)
    lse = m + jnp.log(jnp.sum(jnp.exp(tag_space - m), axis=-1, keepdims=True))
    out_ref[...] = tag_space - lse


def build_forward(embedding_table, w_ih, w_hh, b_ih, b_hh, fc_w, fc_b):
    """One-time weight prep (hoisted out of the hot path) + a jitted batched forward fn.

    Returned fn: token_ids (N, S) int32 -> log-probs (N, S, num_tags). The module's
    single-sentence forward is the N == 1 case.
    """
    emb_table = jnp.asarray(embedding_table, jnp.float32)
    four_h, emb_dim = w_ih.shape
    hidden = four_h // 4
    num_tags = fc_w.shape[0]
    t_pad = max(128, ((num_tags + 127) // 128) * 128)   # lane-dense tag axis

    # One-time: transpose to (in, out) layouts, sum biases, pad fc to 128 lanes.
    wih_t = jnp.asarray(w_ih.T, jnp.float32)                                   # (E, 4H)
    whh_t = jnp.asarray(w_hh.T, jnp.float32)                                   # (H, 4H)
    b = (jnp.asarray(b_ih, jnp.float32)
         + jnp.asarray(b_hh, jnp.float32)).reshape(1, four_h)                  # (1, 4H)
    # fc weight columns padded with zeros; bias lanes padded with a large negative value so the
    # log-softmax max/sum over padded lanes is unaffected (safe in f32: exp underflows to 0).
    fcw_p = jnp.zeros((hidden, t_pad), jnp.float32).at[:, :num_tags].set(
        jnp.asarray(fc_w.T, jnp.float32))                                      # (H, T_pad)
    fcb_p = jnp.full((1, t_pad), -1e30, jnp.float32).at[0, :num_tags].set(
        jnp.asarray(fc_b, jnp.float32))                                        # (1, T_pad)

    @jax.jit
    def forward(token_ids):
        n_sent, seq_len = token_ids.shape
        s_pad = max(8, ((seq_len + 7) // 8) * 8)        # sublane-dense sequence axis

        # Embedding gather + pad kept under the same jit as the kernel (no extra dispatches).
        embeds = jnp.take(emb_table, token_ids, axis=0).astype(jnp.float32)    # (N, S, E)
        embeds_p = jnp.zeros((n_sent, s_pad, emb_dim),
                             jnp.float32).at[:, :seq_len, :].set(embeds)       # (N, S_pad, E)

        kernel = functools.partial(lstm_tagger_kernel, seq_len=seq_len)

        flops = n_sent * (2 * s_pad * emb_dim * four_h
                          + 2 * seq_len * hidden * four_h
                          + 2 * s_pad * hidden * t_pad)
        transcendentals = n_sent * (seq_len * (four_h + hidden) + s_pad * (t_pad + 1))
        bytes_accessed = 4 * (embeds_p.size + wih_t.size + whh_t.size + b.size
                              + fcw_p.size + fcb_p.size + n_sent * s_pad * t_pad)

        out = pl.pallas_call(
            kernel,
            out_shape=jax.ShapeDtypeStruct((n_sent, s_pad, t_pad), jnp.float32),
            grid=(n_sent,),
            in_specs=[
                pl.BlockSpec((None, s_pad, emb_dim), lambda n: (n, 0, 0)),  # per-sentence embeds
                pl.BlockSpec((emb_dim, four_h), lambda n: (0, 0)),          # W_ih^T (resident)
                pl.BlockSpec((hidden, four_h), lambda n: (0, 0)),           # W_hh^T (resident)
                pl.BlockSpec((1, four_h), lambda n: (0, 0)),                # b_ih + b_hh
                pl.BlockSpec((hidden, t_pad), lambda n: (0, 0)),            # fc weight (padded)
                pl.BlockSpec((1, t_pad), lambda n: (0, 0)),                 # fc bias (padded)
            ],
            out_specs=pl.BlockSpec((None, s_pad, t_pad), lambda n: (n, 0, 0)),
            scratch_shapes=[
                pltpu.VMEM((s_pad, four_h), jnp.float32),   # pre-computed input gates
                pltpu.VMEM((s_pad, hidden), jnp.float32),   # all hidden states
            ],
            compiler_params=pltpu.CompilerParams(dimension_semantics=("parallel",)),
            cost_estimate=pl.CostEstimate(flops=flops,
                                          transcendentals=transcendentals,
                                          bytes_accessed=bytes_accessed),
        )(embeds_p, wih_t, whh_t, b, fcw_p, fcb_p)

        return out[:, :seq_len, :num_tags]

    return forward


def ref_forward(embeds, w_ih, w_hh, b_ih, b_hh, fc_w, fc_b):
    """Pure-JAX reference with PyTorch nn.LSTM semantics (HIGHEST precision matmuls)."""
    hidden = w_hh.shape[1]
    hp = lax.Precision.HIGHEST

    def step(carry, x_t):
        h, c = carry
        gates = (jnp.dot(x_t, w_ih.T, precision=hp)
                 + jnp.dot(h, w_hh.T, precision=hp) + b_ih + b_hh)
        i, f, g, o = jnp.split(gates, 4)
        i, f, o = jax.nn.sigmoid(i), jax.nn.sigmoid(f), jax.nn.sigmoid(o)
        g = jnp.tanh(g)
        c = f * c + i * g
        h = o * jnp.tanh(c)
        return (h, c), h

    init = (jnp.zeros((hidden,), jnp.float32), jnp.zeros((hidden,), jnp.float32))
    _, hs = lax.scan(step, init, embeds)
    tag_space = jnp.dot(hs, fc_w.T, precision=hp) + fc_b
    return jax.nn.log_softmax(tag_space, axis=1)


if __name__ == "__main__":
    # Small, deterministic synthetic setup consistent with the module's __init__:
    # embedding table (vocab, emb_dim), nn.LSTM(emb_dim, hidden), nn.Linear(hidden, num_tags)
    vocab_size, emb_dim, hidden_dim, num_tags = 50, 16, 32, 8
    seq_len, n_sentences = 10, 3

    key = jax.random.PRNGKey(0)
    ks = jax.random.split(key, 8)
    s = 1.0 / jnp.sqrt(jnp.float32(hidden_dim))

    embedding_data = jax.random.normal(ks[0], (vocab_size, emb_dim), jnp.float32)
    w_ih = jax.random.uniform(ks[1], (4 * hidden_dim, emb_dim), jnp.float32, -s, s)
    w_hh = jax.random.uniform(ks[2], (4 * hidden_dim, hidden_dim), jnp.float32, -s, s)
    b_ih = jax.random.uniform(ks[3], (4 * hidden_dim,), jnp.float32, -s, s)
    b_hh = jax.random.uniform(ks[4], (4 * hidden_dim,), jnp.float32, -s, s)
    fc_w = jax.random.uniform(ks[5], (num_tags, hidden_dim), jnp.float32, -s, s)
    fc_b = jax.random.uniform(ks[6], (num_tags,), jnp.float32, -s, s)

    # "sentences" = sequences of word indices (prepare_sentence output); batched to amortize
    # dispatch over a "parallel" grid axis. TODO(synk): word2emb_idx / tag2idx dict lookups are
    # host-side Python preprocessing, outside the kernel.
    sentences = jax.random.randint(ks[7], (n_sentences, seq_len), 0, vocab_size)

    forward = build_forward(embedding_data, w_ih, w_hh, b_ih, b_hh, fc_w, fc_b)

    tag_scores = jax.block_until_ready(forward(sentences))        # (N, S, T)
    assert tag_scores.shape == (n_sentences, seq_len, num_tags)

    for n in range(n_sentences):
        embeds_n = jnp.take(embedding_data, sentences[n], axis=0)
        ref_n = ref_forward(embeds_n, w_ih, w_hh, b_ih, b_hh, fc_w, fc_b)
        assert jnp.allclose(tag_scores[n], ref_n, atol=1e-4, rtol=1e-4), \
            f"mismatch vs JAX reference on sentence {n}"

    # Module-equivalent single-sentence forward (batch of 1), as in PytorchLstmNetModel.forward.
    single = jax.block_until_ready(forward(sentences[:1]))[0]
    assert single.shape == (seq_len, num_tags)
    assert jnp.allclose(single, tag_scores[0], atol=1e-5, rtol=1e-5)

    print("KERNEL_OK")
</pallas_src>

<mosaic_0001>
module attributes {stable_mosaic.version = 11 : i64} {
  func.func @lstm_tagger_kernel(%arg0: i32, %arg1: memref<1x16x16xf32, #tpu.memory_space<vmem>>, %arg2: memref<16x128xf32, #tpu.memory_space<vmem>>, %arg3: memref<32x128xf32, #tpu.memory_space<vmem>>, %arg4: memref<1x128xf32, #tpu.memory_space<vmem>>, %arg5: memref<32x128xf32, #tpu.memory_space<vmem>>, %arg6: memref<1x128xf32, #tpu.memory_space<vmem>>, %arg7: memref<1x16x128xf32, #tpu.memory_space<vmem>>, %arg8: memref<16x128xf32, #tpu.memory_space<vmem>>, %arg9: memref<16x32xf32, #tpu.memory_space<vmem>>) attributes {dimension_semantics = [#tpu.dimension_semantics<parallel>], iteration_bounds = array<i64: 3>, scalar_prefetch = 0 : i64, scratch_operands = 2 : i64, tpu.core_type = #tpu.core_type<tc>, window_params = [{transform_indices = @transform_0, window_bounds = array<i64: 1, 16, 16>}, {pipeline_mode = #tpu.pipeline_mode<synchronous>, transform_indices = @transform_1, window_bounds = array<i64: 16, 128>}, {pipeline_mode = #tpu.pipeline_mode<synchronous>, transform_indices = @transform_2, window_bounds = array<i64: 32, 128>}, {pipeline_mode = #tpu.pipeline_mode<synchronous>, transform_indices = @transform_3, window_bounds = array<i64: 1, 128>}, {pipeline_mode = #tpu.pipeline_mode<synchronous>, transform_indices = @transform_4, window_bounds = array<i64: 32, 128>}, {pipeline_mode = #tpu.pipeline_mode<synchronous>, transform_indices = @transform_5, window_bounds = array<i64: 1, 128>}, {transform_indices = @transform_6, window_bounds = array<i64: 1, 16, 128>}]} {
    %c0 = arith.constant 0 : index
    %c0_0 = arith.constant 0 : index
    %c0_1 = arith.constant 0 : index
    %0 = vector.load %arg1[%c0, %c0_0, %c0_1] : memref<1x16x16xf32, #tpu.memory_space<vmem>>, vector<1x16x16xf32>
    %1 = vector.shape_cast %0 : vector<1x16x16xf32> to vector<16x16xf32>
    %c0_2 = arith.constant 0 : index
    %c0_3 = arith.constant 0 : index
    %2 = vector.load %arg2[%c0_2, %c0_3] : memref<16x128xf32, #tpu.memory_space<vmem>>, vector<16x128xf32>
    %cst = arith.constant dense<0.000000e+00> : vector<16x128xf32>
    %3 = tpu.matmul %1, %2, %cst {dimension_numbers = #tpu.dot_dimension_numbers<[1], [0], [0], [1], [0, 0, 1, 1], [], []>} : vector<16x16xf32>, vector<16x128xf32>, vector<16x128xf32> -> vector<16x128xf32>
    %c0_4 = arith.constant 0 : index
    %c0_5 = arith.constant 0 : index
    %4 = vector.load %arg4[%c0_4, %c0_5] : memref<1x128xf32, #tpu.memory_space<vmem>>, vector<1x128xf32>
    %5 = vector.broadcast %4 : vector<1x128xf32> to vector<16x128xf32>
    %6 = arith.addf %3, %5 : vector<16x128xf32>
    %c0_6 = arith.constant 0 : index
    %c0_7 = arith.constant 0 : index
    %7 = vector.load %arg8[%c0_6, %c0_7] : memref<16x128xf32, #tpu.memory_space<vmem>>, vector<16x128xf32>
    tpu.vector_store %arg8[%c0_6, %c0_7], %6 {strides = array<i32>} : memref<16x128xf32, #tpu.memory_space<vmem>>, vector<16x128xf32>,
    %cst_8 = arith.constant 0.000000e+00 : f32
    %8 = vector.broadcast %cst_8 : f32 to vector<6x32xf32>
    %c10 = arith.constant 10 : index
    %c0_9 = arith.constant 0 : index
    %9 = vector.load %arg9[%c10, %c0_9] : memref<16x32xf32, #tpu.memory_space<vmem>>, vector<6x32xf32>
    tpu.vector_store %arg9[%c10, %c0_9], %8 {strides = array<i32>} : memref<16x32xf32, #tpu.memory_space<vmem>>, vector<6x32xf32>,
    %c0_10 = arith.constant 0 : index
    %c0_11 = arith.constant 0 : index
    %10 = vector.load %arg3[%c0_10, %c0_11] : memref<32x128xf32, #tpu.memory_space<vmem>>, vector<32x128xf32>
    %11 = tpu.iota {dimensions = array<i32: 1>} : vector<1x128xi32>
    %c64_i32 = arith.constant 64 : i32
    %12 = vector.broadcast %c64_i32 : i32 to vector<1x128xi32>
    %13 = arith.cmpi sge, %11, %12 : vector<1x128xi32>
    %c96_i32 = arith.constant 96 : i32
    %14 = vector.broadcast %c96_i32 : i32 to vector<1x128xi32>
    %15 = arith.cmpi slt, %11, %14 : vector<1x128xi32>
    %16 = arith.andi %13, %15 : vector<1x128xi1>
    %cst_12 = arith.constant 1.000000e+00 : f32
    %cst_13 = arith.constant 5.000000e-01 : f32
    %17 = vector.broadcast %cst_12 : f32 to vector<1x128xf32>
    %18 = vector.broadcast %cst_13 : f32 to vector<1x128xf32>
    %19 = arith.select %16, %17, %18 : vector<1x128xi1>, vector<1x128xf32>
    %cst_14 = arith.constant 0.000000e+00 : f32
    %cst_15 = arith.constant 5.000000e-01 : f32
    %20 = vector.broadcast %cst_14 : f32 to vector<1x128xf32>
    %21 = vector.broadcast %cst_15 : f32 to vector<1x128xf32>
    %22 = arith.select %16, %20, %21 : vector<1x128xi1>, vector<1x128xf32>
    %cst_16 = arith.constant 0.000000e+00 : f32
    %23 = vector.broadcast %cst_16 : f32 to vector<1x32xf32>
    %cst_17 = arith.constant 0.000000e+00 : f32
    %24 = vector.broadcast %cst_17 : f32 to vector<1x32xf32>
    %c0_i32 = arith.constant 0 : i32
    %25 = arith.index_cast %c0_i32 : i32 to index
    %c0_18 = arith.constant 0 : index
    %26 = vector.load %arg8[%25, %c0_18] : memref<16x128xf32, #tpu.memory_space<vmem>>, vector<1x128xf32>
    %cst_19 = arith.constant dense<0.000000e+00> : vector<1x128xf32>
    %27 = tpu.matmul %23, %10, %cst_19 {dimension_numbers = #tpu.dot_dimension_numbers<[1], [0], [0], [1], [0, 0, 1, 1], [], []>} : vector<1x32xf32>, vector<32x128xf32>, vector<1x128xf32> -> vector<1x128xf32>
    %28 = arith.addf %26, %27 : vector<1x128xf32>
    %29 = arith.mulf %28, %19 : vector<1x128xf32>
    %30 = math.tanh %29 : vector<1x128xf32>
    %31 = arith.mulf %30, %19 : vector<1x128xf32>
    %32 = arith.addf %31, %22 : vector<1x128xf32>
    %33 = vector.extract_strided_slice %32 {offsets = [0, 0], sizes = [1, 32], strides = [1, 1]} : vector<1x128xf32> to vector<1x32xf32>
    %34 = vector.extract_strided_slice %32 {offsets = [0, 32], sizes = [1, 32], strides = [1, 1]} : vector<1x128xf32> to vector<1x32xf32>
    %35 = vector.extract_strided_slice %32 {offsets = [0, 64], sizes = [1, 32], strides = [1, 1]} : vector<1x128xf32> to vector<1x32xf32>
    %36 = vector.extract_strided_slice %32 {offsets = [0, 96], sizes = [1, 32], strides = [1, 1]} : vector<1x128xf32> to vector<1x32xf32>
    %37 = arith.mulf %34, %24 : vector<1x32xf32>
    %38 = arith.mulf %33, %35 : vector<1x32xf32>
    %39 = arith.addf %37, %38 : vector<1x32xf32>
    %40 = math.tanh %39 : vector<1x32xf32>
    %41 = arith.mulf %36, %40 : vector<1x32xf32>
    %42 = arith.index_cast %c0_i32 : i32 to index
    %c0_20 = arith.constant 0 : index
    %43 = vector.load %arg9[%42, %c0_20] : memref<16x32xf32, #tpu.memory_space<vmem>>, vector<1x32xf32>
    tpu.vector_store %arg9[%42, %c0_20], %41 {strides = array<i32>} : memref<16x32xf32, #tpu.memory_space<vmem>>, vector<1x32xf32>,
    %c1_i32 = arith.constant 1 : i32
    %44 = arith.index_cast %c1_i32 : i32 to index
    %c0_21 = arith.constant 0 : index
    %45 = vector.load %arg8[%44, %c0_21] : memref<16x128xf32, #tpu.memory_space<vmem>>, vector<1x128xf32>
    %cst_22 = arith.constant dense<0.000000e+00> : vector<1x128xf32>
    %46 = tpu.matmul %41, %10, %cst_22 {dimension_numbers = #tpu.dot_dimension_numbers<[1], [0], [0], [1], [0, 0, 1, 1], [], []>} : vector<1x32xf32>, vector<32x128xf32>, vector<1x128xf32> -> vector<1x128xf32>
    %47 = arith.addf %45, %46 : vector<1x128xf32>
    %48 = arith.mulf %47, %19 : vector<1x128xf32>
    %49 = math.tanh %48 : vector<1x128xf32>
    %50 = arith.mulf %49, %19 : vector<1x128xf32>
    %51 = arith.addf %50, %22 : vector<1x128xf32>
    %52 = vector.extract_strided_slice %51 {offsets = [0, 0], sizes = [1, 32], strides = [1, 1]} : vector<1x128xf32> to vector<1x32xf32>
    %53 = vector.extract_strided_slice %51 {offsets = [0, 32], sizes = [1, 32], strides = [1, 1]} : vector<1x128xf32> to vector<1x32xf32>
    %54 = vector.extract_strided_slice %51 {offsets = [0, 64], sizes = [1, 32], strides = [1, 1]} : vector<1x128xf32> to vector<1x32xf32>
    %55 = vector.extract_strided_slice %51 {offsets = [0, 96], sizes = [1, 32], strides = [1, 1]} : vector<1x128xf32> to vector<1x32xf32>
    %56 = arith.mulf %53, %39 : vector<1x32xf32>
    %57 = arith.mulf %52, %54 : vector<1x32xf32>
    %58 = arith.addf %56, %57 : vector<1x32xf32>
    %59 = math.tanh %58 : vector<1x32xf32>
    %60 = arith.mulf %55, %59 : vector<1x32xf32>
    %61 = arith.index_cast %c1_i32 : i32 to index
    %c0_23 = arith.constant 0 : index
    %62 = vector.load %arg9[%61, %c0_23] : memref<16x32xf32, #tpu.memory_space<vmem>>, vector<1x32xf32>
    tpu.vector_store %arg9[%61, %c0_23], %60 {strides = array<i32>} : memref<16x32xf32, #tpu.memory_space<vmem>>, vector<1x32xf32>,
    %c2_i32 = arith.constant 2 : i32
    %63 = arith.index_cast %c2_i32 : i32 to index
    %c0_24 = arith.constant 0 : index
    %64 = vector.load %arg8[%63, %c0_24] : memref<16x128xf32, #tpu.memory_space<vmem>>, vector<1x128xf32>
    %cst_25 = arith.constant dense<0.000000e+00> : vector<1x128xf32>
    %65 = tpu.matmul %60, %10, %cst_25 {dimension_numbers = #tpu.dot_dimension_numbers<[1], [0], [0], [1], [0, 0, 1, 1], [], []>} : vector<1x32xf32>, vector<32x128xf32>, vector<1x128xf32> -> vector<1x128xf32>
    %66 = arith.addf %64, %65 : vector<1x128xf32>
    %67 = arith.mulf %66, %19 : vector<1x128xf32>
    %68 = math.tanh %67 : vector<1x128xf32>
    %69 = arith.mulf %68, %19 : vector<1x128xf32>
    %70 = arith.addf %69, %22 : vector<1x128xf32>
    %71 = vector.extract_strided_slice %70 {offsets = [0, 0], sizes = [1, 32], strides = [1, 1]} : vector<1x128xf32> to vector<1x32xf32>
    %72 = vector.extract_strided_slice %70 {offsets = [0, 32], sizes = [1, 32], strides = [1, 1]} : vector<1x128xf32> to vector<1x32xf32>
    %73 = vector.extract_strided_slice %70 {offsets = [0, 64], sizes = [1, 32], strides = [1, 1]} : vector<1x128xf32> to vector<1x32xf32>
    %74 = vector.extract_strided_slice %70 {offsets = [0, 96], sizes = [1, 32], strides = [1, 1]} : vector<1x128xf32> to vector<1x32xf32>
    %75 = arith.mulf %72, %58 : vector<1x32xf32>
    %76 = arith.mulf %71, %73 : vector<1x32xf32>
    %77 = arith.addf %75, %76 : vector<1x32xf32>
    %78 = math.tanh %77 : vector<1x32xf32>
    %79 = arith.mulf %74, %78 : vector<1x32xf32>
    %80 = arith.index_cast %c2_i32 : i32 to index
    %c0_26 = arith.constant 0 : index
    %81 = vector.load %arg9[%80, %c0_26] : memref<16x32xf32, #tpu.memory_space<vmem>>, vector<1x32xf32>
    tpu.vector_store %arg9[%80, %c0_26], %79 {strides = array<i32>} : memref<16x32xf32, #tpu.memory_space<vmem>>, vector<1x32xf32>,
    %c3_i32 = arith.constant 3 : i32
    %82 = arith.index_cast %c3_i32 : i32 to index
    %c0_27 = arith.constant 0 : index
    %83 = vector.load %arg8[%82, %c0_27] : memref<16x128xf32, #tpu.memory_space<vmem>>, vector<1x128xf32>
    %cst_28 = arith.constant dense<0.000000e+00> : vector<1x128xf32>
    %84 = tpu.matmul %79, %10, %cst_28 {dimension_numbers = #tpu.dot_dimension_numbers<[1], [0], [0], [1], [0, 0, 1, 1], [], []>} : vector<1x32xf32>, vector<32x128xf32>, vector<1x128xf32> -> vector<1x128xf32>
    %85 = arith.addf %83, %84 : vector<1x128xf32>
    %86 = arith.mulf %85, %19 : vector<1x128xf32>
    %87 = math.tanh %86 : vector<1x128xf32>
    %88 = arith.mulf %87, %19 : vector<1x128xf32>
    %89 = arith.addf %88, %22 : vector<1x128xf32>
    %90 = vector.extract_strided_slice %89 {offsets = [0, 0], sizes = [1, 32], strides = [1, 1]} : vector<1x128xf32> to vector<1x32xf32>
    %91 = vector.extract_strided_slice %89 {offsets = [0, 32], sizes = [1, 32], strides = [1, 1]} : vector<1x128xf32> to vector<1x32xf32>
    %92 = vector.extract_strided_slice %89 {offsets = [0, 64], sizes = [1, 32], strides = [1, 1]} : vector<1x128xf32> to vector<1x32xf32>
    %93 = vector.extract_strided_slice %89 {offsets = [0, 96], sizes = [1, 32], strides = [1, 1]} : vector<1x128xf32> to vector<1x32xf32>
    %94 = arith.mulf %91, %77 : vector<1x32xf32>
    %95 = arith.mulf %90, %92 : vector<1x32xf32>
    %96 = arith.addf %94, %95 : vector<1x32xf32>
    %97 = math.tanh %96 : vector<1x32xf32>
    %98 = arith.mulf %93, %97 : vector<1x32xf32>
    %99 = arith.index_cast %c3_i32 : i32 to index
    %c0_29 = arith.constant 0 : index
    %100 = vector.load %arg9[%99, %c0_29] : memref<16x32xf32, #tpu.memory_space<vmem>>, vector<1x32xf32>
    tpu.vector_store %arg9[%99, %c0_29], %98 {strides = array<i32>} : memref<16x32xf32, #tpu.memory_space<vmem>>, vector<1x32xf32>,
    %c4_i32 = arith.constant 4 : i32
    %101 = arith.index_cast %c4_i32 : i32 to index
    %c0_30 = arith.constant 0 : index
    %102 = vector.load %arg8[%101, %c0_30] : memref<16x128xf32, #tpu.memory_space<vmem>>, vector<1x128xf32>
    %cst_31 = arith.constant dense<0.000000e+00> : vector<1x128xf32>
    %103 = tpu.matmul %98, %10, %cst_31 {dimension_numbers = #tpu.dot_dimension_numbers<[1], [0], [0], [1], [0, 0, 1, 1], [], []>} : vector<1x32xf32>, vector<32x128xf32>, vector<1x128xf32> -> vector<1x128xf32>
    %104 = arith.addf %102, %103 : vector<1x128xf32>
    %105 = arith.mulf %104, %19 : vector<1x128xf32>
    %106 = math.tanh %105 : vector<1x128xf32>
    %107 = arith.mulf %106, %19 : vector<1x128xf32>
    %108 = arith.addf %107, %22 : vector<1x128xf32>
    %109 = vector.extract_strided_slice %108 {offsets = [0, 0], sizes = [1, 32], strides = [1, 1]} : vector<1x128xf32> to vector<1x32xf32>
    %110 = vector.extract_strided_slice %108 {offsets = [0, 32], sizes = [1, 32], strides = [1, 1]} : vector<1x128xf32> to vector<1x32xf32>
    %111 = vector.extract_strided_slice %108 {offsets = [0, 64], sizes = [1, 32], strides = [1, 1]} : vector<1x128xf32> to vector<1x32xf32>
    %112 = vector.extract_strided_slice %108 {offsets = [0, 96], sizes = [1, 32], strides = [1, 1]} : vector<1x128xf32> to vector<1x32xf32>
    %113 = arith.mulf %110, %96 : vector<1x32xf32>
    %114 = arith.mulf %109, %111 : vector<1x32xf32>
    %115 = arith.addf %113, %114 : vector<1x32xf32>
    %116 = math.tanh %115 : vector<1x32xf32>
    %117 = arith.mulf %112, %116 : vector<1x32xf32>
    %118 = arith.index_cast %c4_i32 : i32 to index
    %c0_32 = arith.constant 0 : index
    %119 = vector.load %arg9[%118, %c0_32] : memref<16x32xf32, #tpu.memory_space<vmem>>, vector<1x32xf32>
    tpu.vector_store %arg9[%118, %c0_32], %117 {strides = array<i32>} : memref<16x32xf32, #tpu.memory_space<vmem>>, vector<1x32xf32>,
    %c5_i32 = arith.constant 5 : i32
    %120 = arith.index_cast %c5_i32 : i32 to index
    %c0_33 = arith.constant 0 : index
    %121 = vector.load %arg8[%120, %c0_33] : memref<16x128xf32, #tpu.memory_space<vmem>>, vector<1x128xf32>
    %cst_34 = arith.constant dense<0.000000e+00> : vector<1x128xf32>
    %122 = tpu.matmul %117, %10, %cst_34 {dimension_numbers = #tpu.dot_dimension_numbers<[1], [0], [0], [1], [0, 0, 1, 1], [], []>} : vector<1x32xf32>, vector<32x128xf32>, vector<1x128xf32> -> vector<1x128xf32>
    %123 = arith.addf %121, %122 : vector<1x128xf32>
    %124 = arith.mulf %123, %19 : vector<1x128xf32>
    %125 = math.tanh %124 : vector<1x128xf32>
    %126 = arith.mulf %125, %19 : vector<1x128xf32>
    %127 = arith.addf %126, %22 : vector<1x128xf32>
    %128 = vector.extract_strided_slice %127 {offsets = [0, 0], sizes = [1, 32], strides = [1, 1]} : vector<1x128xf32> to vector<1x32xf32>
    %129 = vector.extract_strided_slice %127 {offsets = [0, 32], sizes = [1, 32], strides = [1, 1]} : vector<1x128xf32> to vector<1x32xf32>
    %130 = vector.extract_strided_slice %127 {offsets = [0, 64], sizes = [1, 32], strides = [1, 1]} : vector<1x128xf32> to vector<1x32xf32>
    %131 = vector.extract_strided_slice %127 {offsets = [0, 96], sizes = [1, 32], strides = [1, 1]} : vector<1x128xf32> to vector<1x32xf32>
    %132 = arith.mulf %129, %115 : vector<1x32xf32>
    %133 = arith.mulf %128, %130 : vector<1x32xf32>
    %134 = arith.addf %132, %133 : vector<1x32xf32>
    %135 = math.tanh %134 : vector<1x32xf32>
    %136 = arith.mulf %131, %135 : vector<1x32xf32>
    %137 = arith.index_cast %c5_i32 : i32 to index
    %c0_35 = arith.constant 0 : index
    %138 = vector.load %arg9[%137, %c0_35] : memref<16x32xf32, #tpu.memory_space<vmem>>, vector<1x32xf32>
    tpu.vector_store %arg9[%137, %c0_35], %136 {strides = array<i32>} : memref<16x32xf32, #tpu.memory_space<vmem>>, vector<1x32xf32>,
    %c6_i32 = arith.constant 6 : i32
    %139 = arith.index_cast %c6_i32 : i32 to index
    %c0_36 = arith.constant 0 : index
    %140 = vector.load %arg8[%139, %c0_36] : memref<16x128xf32, #tpu.memory_space<vmem>>, vector<1x128xf32>
    %cst_37 = arith.constant dense<0.000000e+00> : vector<1x128xf32>
    %141 = tpu.matmul %136, %10, %cst_37 {dimension_numbers = #tpu.dot_dimension_numbers<[1], [0], [0], [1], [0, 0, 1, 1], [], []>} : vector<1x32xf32>, vector<32x128xf32>, vector<1x128xf32> -> vector<1x128xf32>
    %142 = arith.addf %140, %141 : vector<1x128xf32>
    %143 = arith.mulf %142, %19 : vector<1x128xf32>
    %144 = math.tanh %143 : vector<1x128xf32>
    %145 = arith.mulf %144, %19 : vector<1x128xf32>
    %146 = arith.addf %145, %22 : vector<1x128xf32>
    %147 = vector.extract_strided_slice %146 {offsets = [0, 0], sizes = [1, 32], strides = [1, 1]} : vector<1x128xf32> to vector<1x32xf32>
    %148 = vector.extract_strided_slice %146 {offsets = [0, 32], sizes = [1, 32], strides = [1, 1]} : vector<1x128xf32> to vector<1x32xf32>
    %149 = vector.extract_strided_slice %146 {offsets = [0, 64], sizes = [1, 32], strides = [1, 1]} : vector<1x128xf32> to vector<1x32xf32>
    %150 = vector.extract_strided_slice %146 {offsets = [0, 96], sizes = [1, 32], strides = [1, 1]} : vector<1x128xf32> to vector<1x32xf32>
    %151 = arith.mulf %148, %134 : vector<1x32xf32>
    %152 = arith.mulf %147, %149 : vector<1x32xf32>
    %153 = arith.addf %151, %152 : vector<1x32xf32>
    %154 = math.tanh %153 : vector<1x32xf32>
    %155 = arith.mulf %150, %154 : vector<1x32xf32>
    %156 = arith.index_cast %c6_i32 : i32 to index
    %c0_38 = arith.constant 0 : index
    %157 = vector.load %arg9[%156, %c0_38] : memref<16x32xf32, #tpu.memory_space<vmem>>, vector<1x32xf32>
    tpu.vector_store %arg9[%156, %c0_38], %155 {strides = array<i32>} : memref<16x32xf32, #tpu.memory_space<vmem>>, vector<1x32xf32>,
    %c7_i32 = arith.constant 7 : i32
    %158 = arith.index_cast %c7_i32 : i32 to index
    %c0_39 = arith.constant 0 : index
    %159 = vector.load %arg8[%158, %c0_39] : memref<16x128xf32, #tpu.memory_space<vmem>>, vector<1x128xf32>
    %cst_40 = arith.constant dense<0.000000e+00> : vector<1x128xf32>
    %160 = tpu.matmul %155, %10, %cst_40 {dimension_numbers = #tpu.dot_dimension_numbers<[1], [0], [0], [1], [0, 0, 1, 1], [], []>} : vector<1x32xf32>, vector<32x128xf32>, vector<1x128xf32> -> vector<1x128xf32>
    %161 = arith.addf %159, %160 : vector<1x128xf32>
    %162 = arith.mulf %161, %19 : vector<1x128xf32>
    %163 = math.tanh %162 : vector<1x128xf32>
    %164 = arith.mulf %163, %19 : vector<1x128xf32>
    %165 = arith.addf %164, %22 : vector<1x128xf32>
    %166 = vector.extract_strided_slice %165 {offsets = [0, 0], sizes = [1, 32], strides = [1, 1]} : vector<1x128xf32> to vector<1x32xf32>
    %167 = vector.extract_strided_slice %165 {offsets = [0, 32], sizes = [1, 32], strides = [1, 1]} : vector<1x128xf32> to vector<1x32xf32>
    %168 = vector.extract_strided_slice %165 {offsets = [0, 64], sizes = [1, 32], strides = [1, 1]} : vector<1x128xf32> to vector<1x32xf32>
    %169 = vector.extract_strided_slice %165 {offsets = [0, 96], sizes = [1, 32], strides = [1, 1]} : vector<1x128xf32> to vector<1x32xf32>
    %170 = arith.mulf %167, %153 : vector<1x32xf32>
    %171 = arith.mulf %166, %168 : vector<1x32xf32>
    %172 = arith.addf %170, %171 : vector<1x32xf32>
    %173 = math.tanh %172 : vector<1x32xf32>
    %174 = arith.mulf %169, %173 : vector<1x32xf32>
    %175 = arith.index_cast %c7_i32 : i32 to index
    %c0_41 = arith.constant 0 : index
    %176 = vector.load %arg9[%175, %c0_41] : memref<16x32xf32, #tpu.memory_space<vmem>>, vector<1x32xf32>
    tpu.vector_store %arg9[%175, %c0_41], %174 {strides = array<i32>} : memref<16x32xf32, #tpu.memory_space<vmem>>, vector<1x32xf32>,
    %c8_i32 = arith.constant 8 : i32
    %177 = arith.index_cast %c8_i32 : i32 to index
    %c0_42 = arith.constant 0 : index
    %178 = vector.load %arg8[%177, %c0_42] : memref<16x128xf32, #tpu.memory_space<vmem>>, vector<1x128xf32>
    %cst_43 = arith.constant dense<0.000000e+00> : vector<1x128xf32>
    %179 = tpu.matmul %174, %10, %cst_43 {dimension_numbers = #tpu.dot_dimension_numbers<[1], [0], [0], [1], [0, 0, 1, 1], [], []>} : vector<1x32xf32>, vector<32x128xf32>, vector<1x128xf32> -> vector<1x128xf32>
    %180 = arith.addf %178, %179 : vector<1x128xf32>
    %181 = arith.mulf %180, %19 : vector<1x128xf32>
    %182 = math.tanh %181 : vector<1x128xf32>
    %183 = arith.mulf %182, %19 : vector<1x128xf32>
    %184 = arith.addf %183, %22 : vector<1x128xf32>
    %185 = vector.extract_strided_slice %184 {offsets = [0, 0], sizes = [1, 32], strides = [1, 1]} : vector<1x128xf32> to vector<1x32xf32>
    %186 = vector.extract_strided_slice %184 {offsets = [0, 32], sizes = [1, 32], strides = [1, 1]} : vector<1x128xf32> to vector<1x32xf32>
    %187 = vector.extract_strided_slice %184 {offsets = [0, 64], sizes = [1, 32], strides = [1, 1]} : vector<1x128xf32> to vector<1x32xf32>
    %188 = vector.extract_strided_slice %184 {offsets = [0, 96], sizes = [1, 32], strides = [1, 1]} : vector<1x128xf32> to vector<1x32xf32>
    %189 = arith.mulf %186, %172 : vector<1x32xf32>
    %190 = arith.mulf %185, %187 : vector<1x32xf32>
    %191 = arith.addf %189, %190 : vector<1x32xf32>
    %192 = math.tanh %191 : vector<1x32xf32>
    %193 = arith.mulf %188, %192 : vector<1x32xf32>
    %194 = arith.index_cast %c8_i32 : i32 to index
    %c0_44 = arith.constant 0 : index
    %195 = vector.load %arg9[%194, %c0_44] : memref<16x32xf32, #tpu.memory_space<vmem>>, vector<1x32xf32>
    tpu.vector_store %arg9[%194, %c0_44], %193 {strides = array<i32>} : memref<16x32xf32, #tpu.memory_space<vmem>>, vector<1x32xf32>,
    %c9_i32 = arith.constant 9 : i32
    %196 = arith.index_cast %c9_i32 : i32 to index
    %c0_45 = arith.constant 0 : index
    %197 = vector.load %arg8[%196, %c0_45] : memref<16x128xf32, #tpu.memory_space<vmem>>, vector<1x128xf32>
    %cst_46 = arith.constant dense<0.000000e+00> : vector<1x128xf32>
    %198 = tpu.matmul %193, %10, %cst_46 {dimension_numbers = #tpu.dot_dimension_numbers<[1], [0], [0], [1], [0, 0, 1, 1], [], []>} : vector<1x32xf32>, vector<32x128xf32>, vector<1x128xf32> -> vector<1x128xf32>
    %199 = arith.addf %197, %198 : vector<1x128xf32>
    %200 = arith.mulf %199, %19 : vector<1x128xf32>
    %201 = math.tanh %200 : vector<1x128xf32>
    %202 = arith.mulf %201, %19 : vector<1x128xf32>
    %203 = arith.addf %202, %22 : vector<1x128xf32>
    %204 = vector.extract_strided_slice %203 {offsets = [0, 0], sizes = [1, 32], strides = [1, 1]} : vector<1x128xf32> to vector<1x32xf32>
    %205 = vector.extract_strided_slice %203 {offsets = [0, 32], sizes = [1, 32], strides = [1, 1]} : vector<1x128xf32> to vector<1x32xf32>
    %206 = vector.extract_strided_slice %203 {offsets = [0, 64], sizes = [1, 32], strides = [1, 1]} : vector<1x128xf32> to vector<1x32xf32>
    %207 = vector.extract_strided_slice %203 {offsets = [0, 96], sizes = [1, 32], strides = [1, 1]} : vector<1x128xf32> to vector<1x32xf32>
    %208 = arith.mulf %205, %191 : vector<1x32xf32>
    %209 = arith.mulf %204, %206 : vector<1x32xf32>
    %210 = arith.addf %208, %209 : vector<1x32xf32>
    %211 = math.tanh %210 : vector<1x32xf32>
    %212 = arith.mulf %207, %211 : vector<1x32xf32>
    %213 = arith.index_cast %c9_i32 : i32 to index
    %c0_47 = arith.constant 0 : index
    %214 = vector.load %arg9[%213, %c0_47] : memref<16x32xf32, #tpu.memory_space<vmem>>, vector<1x32xf32>
    tpu.vector_store %arg9[%213, %c0_47], %212 {strides = array<i32>} : memref<16x32xf32, #tpu.memory_space<vmem>>, vector<1x32xf32>,
    %c10_i32 = arith.constant 10 : i32
    %c0_48 = arith.constant 0 : index
    %c0_49 = arith.constant 0 : index
    %215 = vector.load %arg9[%c0_48, %c0_49] : memref<16x32xf32, #tpu.memory_space<vmem>>, vector<16x32xf32>
    %c0_50 = arith.constant 0 : index
    %c0_51 = arith.constant 0 : index
    %216 = vector.load %arg5[%c0_50, %c0_51] : memref<32x128xf32, #tpu.memory_space<vmem>>, vector<32x128xf32>
    %cst_52 = arith.constant dense<0.000000e+00> : vector<16x128xf32>
    %217 = tpu.matmul %215, %216, %cst_52 {dimension_numbers = #tpu.dot_dimension_numbers<[1], [0], [0], [1], [0, 0, 1, 1], [], []>} : vector<16x32xf32>, vector<32x128xf32>, vector<16x128xf32> -> vector<16x128xf32>
    %c0_53 = arith.constant 0 : index
    %c0_54 = arith.constant 0 : index
    %218 = vector.load %arg6[%c0_53, %c0_54] : memref<1x128xf32, #tpu.memory_space<vmem>>, vector<1x128xf32>
    %219 = vector.broadcast %218 : vector<1x128xf32> to vector<16x128xf32>
    %220 = arith.addf %217, %219 : vector<16x128xf32>
    %cst_55 = arith.constant dense<0xFF800000> : vector<16xf32>
    %221 = vector.multi_reduction <maximumf>, %220, %cst_55 [1] : vector<16x128xf32> to vector<16xf32>
    %222 = vector.shape_cast %221 : vector<16xf32> to vector<16x1xf32>
    %223 = vector.broadcast %222 : vector<16x1xf32> to vector<16x128xf32>
    %224 = arith.subf %220, %223 : vector<16x128xf32>
    %225 = math.exp %224 : vector<16x128xf32>
    %cst_56 = arith.constant dense<0.000000e+00> : vector<16xf32>
    %226 = vector.multi_reduction <add>, %225, %cst_56 [1] : vector<16x128xf32> to vector<16xf32>
    %227 = vector.shape_cast %226 : vector<16xf32> to vector<16x1xf32>
    %228 = math.log %227 : vector<16x1xf32>
    %229 = arith.addf %222, %228 : vector<16x1xf32>
    %230 = vector.broadcast %229 : vector<16x1xf32> to vector<16x128xf32>
    %231 = arith.subf %220, %230 : vector<16x128xf32>
    %c0_57 = arith.constant 0 : index
    %c0_58 = arith.constant 0 : index
    %c0_59 = arith.constant 0 : index
    %232 = vector.load %arg7[%c0_57, %c0_58, %c0_59] : memref<1x16x128xf32, #tpu.memory_space<vmem>>, vector<1x16x128xf32>
    %233 = vector.shape_cast %232 : vector<1x16x128xf32> to vector<16x128xf32>
    %234 = vector.shape_cast %231 : vector<16x128xf32> to vector<1x16x128xf32>
    tpu.vector_store %arg7[%c0_57, %c0_58, %c0_59], %234 {strides = array<i32>} : memref<1x16x128xf32, #tpu.memory_space<vmem>>, vector<1x16x128xf32>,
    return
  }
  func.func @transform_0(%arg0: i32) -> (i32, i32, i32) {
    %c0_i32 = arith.constant 0 : i32
    %c0_i32_0 = arith.constant 0 : i32
    %c0_i32_1 = arith.constant 0 : i32
    return %arg0, %c0_i32, %c0_i32_0 : i32, i32, i32
  }
  func.func @transform_1(%arg0: i32) -> (i32, i32) {
    %c0_i32 = arith.constant 0 : i32
    %c0_i32_0 = arith.constant 0 : i32
    %c0_i32_1 = arith.constant 0 : i32
    return %c0_i32, %c0_i32_0 : i32, i32
  }
  func.func @transform_2(%arg0: i32) -> (i32, i32) {
    %c0_i32 = arith.constant 0 : i32
    %c0_i32_0 = arith.constant 0 : i32
    %c0_i32_1 = arith.constant 0 : i32
    return %c0_i32, %c0_i32_0 : i32, i32
  }
  func.func @transform_3(%arg0: i32) -> (i32, i32) {
    %c0_i32 = arith.constant 0 : i32
    %c0_i32_0 = arith.constant 0 : i32
    %c0_i32_1 = arith.constant 0 : i32
    return %c0_i32, %c0_i32_0 : i32, i32
  }
  func.func @transform_4(%arg0: i32) -> (i32, i32) {
    %c0_i32 = arith.constant 0 : i32
    %c0_i32_0 = arith.constant 0 : i32
    %c0_i32_1 = arith.constant 0 : i32
    return %c0_i32, %c0_i32_0 : i32, i32
  }
  func.func @transform_5(%arg0: i32) -> (i32, i32) {
    %c0_i32 = arith.constant 0 : i32
    %c0_i32_0 = arith.constant 0 : i32
    %c0_i32_1 = arith.constant 0 : i32
    return %c0_i32, %c0_i32_0 : i32, i32
  }
  func.func @transform_6(%arg0: i32) -> (i32, i32, i32) {
    %c0_i32 = arith.constant 0 : i32
    %c0_i32_0 = arith.constant 0 : i32
    %c0_i32_1 = arith.constant 0 : i32
    return %arg0, %c0_i32, %c0_i32_0 : i32, i32, i32
  }
}

</mosaic_0001>

<llo_original>
// kernel: forward.1
$region0: #{forward.1}
  #allocation0 [shape = 'u32[]', space=smem, size = 0x4, offset = 0x4, fixed_abs, tag = 'smem constant byte address 0x4 - core index']
  #allocation1 [shape = 'u32[144,128]{1,0:T(1,128)}', space=vmem, size = 0x12000, scoped, tag = 'internal scratch']
  #allocation2 [shape = 'f32[16,128]{1,0:T(8,128)}', space=vmem, size = 0x2000, scoped, tag = 'scratch operand']
  #allocation3 [shape = 'f32[16,32]{1,0:T(8,128)}', space=vmem, size = 0x2000, scoped, tag = 'scratch operand']
  %s0 = inlined_call_operand.vmem [shape: f32[3,16,16], index: 0, kind: input, shape index: {}]
  %s1 = inlined_call_operand.vmem [shape: f32[16,128], index: 1, kind: input, shape index: {}]
  %s2 = inlined_call_operand.vmem [shape: f32[32,128], index: 2, kind: input, shape index: {}]
  %s3 = inlined_call_operand.vmem [shape: f32[1,128], index: 3, kind: input, shape index: {}]
  %s4 = inlined_call_operand.vmem [shape: f32[32,128], index: 4, kind: input, shape index: {}]
  %s5 = inlined_call_operand.vmem [shape: f32[1,128], index: 5, kind: input, shape index: {}]
  %s6 = inlined_call_operand.vmem [shape: f32[3,16,128], index: 6, kind: output, shape index: {}]
  %s7 = sld [smem:[#allocation0]]
  $region57: #{forward.1} parent=0
    _
  %s9 = ssub.s32 1, %s7
  %s10 = scalar_select 0, %s9, %s7
  loop: start=0, step=1, limit=5
  $region2: #{forward.1} parent=0 // loop_pre_header
    _
  $region3: #{forward.1} parent=0 // loop_header
    %s12 = sphi 0, %s16
    %p13 = scmp.ge.s32.totalorder %s12, 5
    %s22 = sphi 0, %s24
    %s25 = sphi 0, %s22
    %s26 = sphi 0, %s25
    %s42 = sphi 0, %s26
    %s46 = sphi 0, %s46
    %s48 = sphi 0, %s46
    %s49 = sphi 0, %s48
    %s63 = sphi 0, %s49
    %s67 = sphi 0, %s67
    %s69 = sphi 0, %s67
    %s70 = sphi 0, %s69
    %s84 = sphi 0, %s70
    %s88 = sphi 0, %s88
    %s90 = sphi 0, %s88
    %s91 = sphi 0, %s90
    %s105 = sphi 0, %s91
    %s109 = sphi 0, %s109
    %s111 = sphi 0, %s109
    %s112 = sphi 0, %s111
    %s126 = sphi 0, %s112
    %s130 = sphi 0, %s130
    %s132 = sphi 0, %s130
    %s133 = sphi 0, %s132
    %s147 = sphi 0, %s133
    %s153 = sphi 0, %s155
    %s156 = sphi 0, %s153
    %s157 = sphi 0, %s156
    %s173 = sphi 0, %s157
  $region4: #{forward.1} parent=0 // loop_header_branch
    %15 = sbr.rel (%p13) target = $region8
  $region5: #{forward.1} parent=0 // loop_body
    %s17 = ssub.s32 %s12, 1
    %s18 = ssub.s32 %s12, 2
    %s19 = sadd.s32 %s12, 1
    %s20 = ssub.s32 %s12, %s19
    %p21 = scmp.eq.s32.totalorder %s20, 0
    %s23 = sadd.s32 %s22, 1
    %s24 = scalar_select %p21, %s22, %s23
    %p27 = pneg %p21
    %p28 = scmp.eq.s32.totalorder %s12, 2
    %p29 = por %p27, %p28
    %p30 = scmp.ne.s32.totalorder %s22, %s25
    %p31 = scmp.eq.s32.totalorder %s12, 0
    %p32 = por %p30, %p31
    %p33 = scmp.ne.s32.totalorder %s22, %s25
    %p34 = scmp.eq.s32.totalorder %s17, 2
    %p35 = por %p33, %p34
    %p36 = scmp.ne.s32.totalorder %s25, %s26
    %p37 = scmp.eq.s32.totalorder %s17, 0
    %p38 = por %p36, %p37
    %p39 = scmp.ne.s32.totalorder %s25, %s26
    %p40 = scmp.eq.s32.totalorder %s18, 2
    %p41 = por %p39, %p40
    %p43 = scmp.ne.s32.totalorder %s26, %s42
    %p44 = scmp.eq.s32.totalorder %s18, 0
    %p45 = por %p43, %p44
    %s47 = sadd.s32 %s46, 1
    %p50 = scmp.eq.s32.totalorder %s12, 2
    %p51 = scmp.ne.s32.totalorder %s46, %s48
    %p52 = scmp.eq.s32.totalorder %s12, 0
    %p53 = por %p51, %p52
    %p54 = scmp.ne.s32.totalorder %s46, %s48
    %p55 = scmp.eq.s32.totalorder %s17, 2
    %p56 = por %p54, %p55
    %p57 = scmp.ne.s32.totalorder %s48, %s49
    %p58 = scmp.eq.s32.totalorder %s17, 0
    %p59 = por %p57, %p58
    %p60 = scmp.ne.s32.totalorder %s48, %s49
    %p61 = scmp.eq.s32.totalorder %s18, 2
    %p62 = por %p60, %p61
    %p64 = scmp.ne.s32.totalorder %s49, %s63
    %p65 = scmp.eq.s32.totalorder %s18, 0
    %p66 = por %p64, %p65
    %s68 = sadd.s32 %s67, 1
    %p71 = scmp.eq.s32.totalorder %s12, 2
    %p72 = scmp.ne.s32.totalorder %s67, %s69
    %p73 = scmp.eq.s32.totalorder %s12, 0
    %p74 = por %p72, %p73
    %p75 = scmp.ne.s32.totalorder %s67, %s69
    %p76 = scmp.eq.s32.totalorder %s17, 2
    %p77 = por %p75, %p76
    %p78 = scmp.ne.s32.totalorder %s69, %s70
    %p79 = scmp.eq.s32.totalorder %s17, 0
    %p80 = por %p78, %p79
    %p81 = scmp.ne.s32.totalorder %s69, %s70
    %p82 = scmp.eq.s32.totalorder %s18, 2
    %p83 = por %p81, %p82
    %p85 = scmp.ne.s32.totalorder %s70, %s84
    %p86 = scmp.eq.s32.totalorder %s18, 0
    %p87 = por %p85, %p86
    %s89 = sadd.s32 %s88, 1
    %p92 = scmp.eq.s32.totalorder %s12, 2
    %p93 = scmp.ne.s32.totalorder %s88, %s90
    %p94 = scmp.eq.s32.totalorder %s12, 0
    %p95 = por %p93, %p94
    %p96 = scmp.ne.s32.totalorder %s88, %s90
    %p97 = scmp.eq.s32.totalorder %s17, 2
    %p98 = por %p96, %p97
    %p99 = scmp.ne.s32.totalorder %s90, %s91
    %p100 = scmp.eq.s32.totalorder %s17, 0
    %p101 = por %p99, %p100
    %p102 = scmp.ne.s32.totalorder %s90, %s91
    %p103 = scmp.eq.s32.totalorder %s18, 2
    %p104 = por %p102, %p103
    %p106 = scmp.ne.s32.totalorder %s91, %s105
    %p107 = scmp.eq.s32.totalorder %s18, 0
    %p108 = por %p106, %p107
    %s110 = sadd.s32 %s109, 1
    %p113 = scmp.eq.s32.totalorder %s12, 2
    %p114 = scmp.ne.s32.totalorder %s109, %s111
    %p115 = scmp.eq.s32.totalorder %s12, 0
    %p116 = por %p114, %p115
    %p117 = scmp.ne.s32.totalorder %s109, %s111
    %p118 = scmp.eq.s32.totalorder %s17, 2
    %p119 = por %p117, %p118
    %p120 = scmp.ne.s32.totalorder %s111, %s112
    %p121 = scmp.eq.s32.totalorder %s17, 0
    %p122 = por %p120, %p121
    %p123 = scmp.ne.s32.totalorder %s111, %s112
    %p124 = scmp.eq.s32.totalorder %s18, 2
    %p125 = por %p123, %p124
    %p127 = scmp.ne.s32.totalorder %s112, %s126
    %p128 = scmp.eq.s32.totalorder %s18, 0
    %p129 = por %p127, %p128
    %s131 = sadd.s32 %s130, 1
    %p134 = scmp.eq.s32.totalorder %s12, 2
    %p135 = scmp.ne.s32.totalorder %s130, %s132
    %p136 = scmp.eq.s32.totalorder %s12, 0
    %p137 = por %p135, %p136
    %p138 = scmp.ne.s32.totalorder %s130, %s132
    %p139 = scmp.eq.s32.totalorder %s17, 2
    %p140 = por %p138, %p139
    %p141 = scmp.ne.s32.totalorder %s132, %s133
    %p142 = scmp.eq.s32.totalorder %s17, 0
    %p143 = por %p141, %p142
    %p144 = scmp.ne.s32.totalorder %s132, %s133
    %p145 = scmp.eq.s32.totalorder %s18, 2
    %p146 = por %p144, %p145
    %p148 = scmp.ne.s32.totalorder %s133, %s147
    %p149 = scmp.eq.s32.totalorder %s18, 0
    %p150 = por %p148, %p149
    %s151 = ssub.s32 %s12, %s19
    %p152 = scmp.eq.s32.totalorder %s151, 0
    %s154 = sadd.s32 %s153, 1
    %s155 = scalar_select %p152, %s153, %s154
    %p158 = pneg %p152
    %p159 = scmp.eq.s32.totalorder %s12, 2
    %p160 = por %p158, %p159
    %p161 = scmp.ne.s32.totalorder %s153, %s156
    %p162 = scmp.eq.s32.totalorder %s12, 0
    %p163 = por %p161, %p162
    %p164 = scmp.ne.s32.totalorder %s153, %s156
    %p165 = scmp.eq.s32.totalorder %s17, 2
    %p166 = por %p164, %p165
    %p167 = scmp.ne.s32.totalorder %s156, %s157
    %p168 = scmp.eq.s32.totalorder %s17, 0
    %p169 = por %p167, %p168
    %p170 = scmp.ne.s32.totalorder %s156, %s157
    %p171 = scmp.eq.s32.totalorder %s18, 2
    %p172 = por %p170, %p171
    %p174 = scmp.ne.s32.totalorder %s157, %s173
    %p175 = scmp.eq.s32.totalorder %s18, 0
    %p176 = por %p174, %p175
    %p177 = scmp.le.s32.totalorder 1, %s12
    %p178 = scmp.lt.s32.totalorder %s12, 4
    %p179 = pnand %p177, %p178
    %p180 = pneg %p179
    // Predicated region
    $region9: #{forward.1} parent=5 // pred_check
      _
    $region10: #{forward.1} parent=5 // pred_check_branch
      %182 = sbr.rel (%p179) target = $region12
    $region11: #{forward.1} parent=5 // pred_region
      %s183 = ssub.s32 %s12, 1
      // Predicated region
      $region13: #{forward.1} parent=11 // pred_check
        %p184 = pneg %p59
      $region14: #{forward.1} parent=11 // pred_check_branch
        %186 = sbr.rel (%p184) target = $region16
      $region15: #{forward.1} parent=11 // pred_region
        _
      $region16: #{forward.1} parent=11 // pred_fallthru
        _
      // Predicated region
      $region17: #{forward.1} parent=11 // pred_check
        %p187 = pneg %p80
      $region18: #{forward.1} parent=11 // pred_check_branch
        %189 = sbr.rel (%p187) target = $region20
      $region19: #{forward.1} parent=11 // pred_region
        _
      $region20: #{forward.1} parent=11 // pred_fallthru
        _
      // Predicated region
      $region21: #{forward.1} parent=11 // pred_check
        %p190 = pneg %p101
      $region22: #{forward.1} parent=11 // pred_check_branch
        %192 = sbr.rel (%p190) target = $region24
      $region23: #{forward.1} parent=11 // pred_region
        _
      $region24: #{forward.1} parent=11 // pred_fallthru
        _
      // Predicated region
      $region25: #{forward.1} parent=11 // pred_check
        %p193 = pneg %p122
      $region26: #{forward.1} parent=11 // pred_check_branch
        %195 = sbr.rel (%p193) target = $region28
      $region27: #{forward.1} parent=11 // pred_region
        _
      $region28: #{forward.1} parent=11 // pred_fallthru
        _
      // Predicated region
      $region29: #{forward.1} parent=11 // pred_check
        %p196 = pneg %p143
      $region30: #{forward.1} parent=11 // pred_check_branch
        %198 = sbr.rel (%p196) target = $region32
      $region31: #{forward.1} parent=11 // pred_region
        _
      $region32: #{forward.1} parent=11 // pred_fallthru
        _
    $region12: #{forward.1} parent=5 // pred_fallthru
      _
    %p199 = scmp.lt.s32.totalorder %s12, 3
    // Predicated region
    $region33: #{forward.1} parent=5 // pred_check
      %p200 = pneg %p199
    $region34: #{forward.1} parent=5 // pred_check_branch
      %202 = sbr.rel (%p200) target = $region36
    $region35: #{forward.1} parent=5 // pred_region
      // Predicated region
      $region37: #{forward.1} parent=35 // pred_check
        %p203 = pneg %p32
      $region38: #{forward.1} parent=35 // pred_check_branch
        %205 = sbr.rel (%p203) target = $region40
      $region39: #{forward.1} parent=35 // pred_region
        %p206 = scmp.lt.s32.totalorder %s12, 2
        %s207 = scalar_select %p206, %s12, 2
        %s208 = smul.addr %s207, 2
        %s209 = smul.addr %s208, 8
        %s210 = scalar_lea.vmem %s0, %s209
      $region40: #{forward.1} parent=35 // pred_fallthru
        _
    $region36: #{forward.1} parent=5 // pred_fallthru
      _
    %p211 = scmp.le.s32.totalorder 1, %s12
    %p212 = scmp.lt.s32.totalorder %s12, 4
    %p213 = pnand %p211, %p212
    %p214 = pneg %p213
    // Predicated region
    $region41: #{forward.1} parent=5 // pred_check
      _
    $region42: #{forward.1} parent=5 // pred_check_branch
      %216 = sbr.rel (%p213) target = $region44
    $region43: #{forward.1} parent=5 // pred_region
      %s217 = ssub.s32 %s12, 1
      %p218 = scmp.lt.s32.totalorder %s17, 2
      %s219 = scalar_select %p218, %s17, 2
      %s220 = smul.addr %s219, 2
      %s221 = smul.addr %s220, 8
      %s222 = scalar_lea.vmem %s0, %s221
      %p223 = pneg %p38
      %p224 = pneg %p35
      %p225 = pneg %p59
      %p226 = pneg %p56
      %p227 = pneg %p80
      %p228 = pneg %p77
      %p229 = pneg %p101
      %p230 = pneg %p98
      %p231 = pneg %p122
      %p232 = pneg %p119
      %p233 = pneg %p143
      %p234 = pneg %p140
      %p235 = pneg %p169
      %p236 = pneg %p166
      %p237 = scmp.lt.s32.totalorder %s17, 2
      %s238 = scalar_select %p237, %s17, 2
      %s239 = smul.addr %s238, 2
      %s240 = smul.addr %s239, 8
      %s241 = scalar_lea.vmem %s6, %s240
      %p242 = scmp.lt.s32.totalorder %s17, 2
      %s243 = scalar_select %p242, %s17, 2
      %s244 = smul.addr %s243, 2
      %s245 = smul.addr %s244, 8
      %s246 = scalar_lea.vmem %s0, %s245
      %p247 = scmp.lt.s32.totalorder %s17, 2
      %s248 = scalar_select %p247, %s17, 2
      %s249 = smul.addr %s248, 2
      %s250 = smul.addr %s249, 8
      %s251 = scalar_lea.vmem %s6, %s250
      %v252 = vld [vmem:[%s246] sm:$0xff]
      %v253 = vld [vmem:[%s246 + $0x8] sm:$0xff]
      %v254 = vld [vmem:[%s1] sm:$0xff]
      %v255 = vld [vmem:[%s1 + $0x8] sm:$0xff]
      %v256 = vld [vmem:[%s3] sm:$0x1]
      %v258 = vlaneseq
      %v259 = vshrl.u32 %v258, 7
      %v260 = vsub.s32 0, %v259
      %v261 = vrot.slane %v256, %v260
      %vm263 = vcmask 130048
      %v265 = vsel %vm263, %v252, 0
      %v268 = vsel %vm263, %v253, 0
      %270 = vmatprep.subr.mxu0 0.0
      %271 = vmatpush1.msra.mxu0 %v254
      %272 = vmatprep.subr.mxu0 0.0
      %273 = vmatpush1.msra.mxu0 %v255
      %274 = vmatprep.subr.mxu0 0.0
      %275 = vmatpush1.msra.mxu0 0.0
      %276 = vmatprep.subr.mxu0 0.0
      %277 = vmatpush1.msra.mxu0 0.0
      %278 = vmatprep.subr.mxu0 0.0
      %279 = vmatpush1.msra.mxu0 0.0
      %280 = vmatprep.subr.mxu0 0.0
      %281 = vmatpush1.msra.mxu0 0.0
      %282 = vmatprep.subr.mxu0 0.0
      %283 = vmatpush1.msra.mxu0 0.0
      %284 = vmatprep.subr.mxu0 0.0
      %285 = vmatpush1.msra.mxu0 0.0
      %286 = vmatprep.subr.mxu0 0.0
      %287 = vmatpush1.msra.mxu0 0.0
      %288 = vmatprep.subr.mxu0 0.0
      %289 = vmatpush1.msra.mxu0 0.0
      %290 = vmatprep.subr.mxu0 0.0
      %291 = vmatpush1.msra.mxu0 0.0
      %292 = vmatprep.subr.mxu0 0.0
      %293 = vmatpush1.msra.mxu0 0.0
      %294 = vmatprep.subr.mxu0 0.0
      %295 = vmatpush1.msra.mxu0 0.0
      %296 = vmatprep.subr.mxu0 0.0
      %297 = vmatpush1.msra.mxu0 0.0
      %298 = vmatprep.subr.mxu0 0.0
      %299 = vmatpush1.msra.mxu0 0.0
      %300 = vmatprep.subr.mxu0 0.0
      %301 = vmatpush1.msra.mxu0 0.0
      %302 = vmatprep.subr.mxu0 0.0
      %303 = vmatpush1.msra.mxu0 0.0
      %304 = vmatprep.subr.mxu0 0.0
      %305 = vmatpush1.msra.mxu0 0.0
      %306 = vmatprep.subr.mxu0 0.0
      %307 = vmatpush1.msra.mxu0 0.0
      %308 = vmatprep.subr.mxu0 0.0
      %309 = vmatpush1.msra.mxu0 0.0
      %310 = vmatprep.subr.mxu0 0.0
      %311 = vmatpush1.msra.mxu0 0.0
      %312 = vmatprep.subr.mxu0 0.0
      %313 = vmatpush1.msra.mxu0 0.0
      %314 = vmatprep.subr.mxu0 0.0
      %315 = vmatpush1.msra.mxu0 0.0
      %316 = vmatprep.subr.mxu0 0.0
      %317 = vmatpush1.msra.mxu0 0.0
      %318 = vmatprep.subr.mxu0 0.0
      %319 = vmatpush1.msra.mxu0 0.0
      %320 = vmatprep.subr.mxu0 0.0
      %321 = vmatpush1.msra.mxu0 0.0
      %322 = vmatprep.subr.mxu0 0.0
      %323 = vmatpush1.msra.mxu0 0.0
      %324 = vmatprep.subr.mxu0 0.0
      %325 = vmatpush1.msra.mxu0 0.0
      %326 = vmatprep.subr.mxu0 0.0
      %327 = vmatpush1.msra.mxu0 0.0
      %328 = vmatprep.subr.mxu0 0.0
      %329 = vmatpush1.msra.mxu0 0.0
      %330 = vmatprep.subr.mxu0 0.0
      %331 = vmatpush1.msra.mxu0 0.0
      %332 = vmatprep.subr.mxu0 0.0
      %333 = vmatpush1.msra.mxu0 0.0
      %334 = vmatprep.mubr.f32.mxu0 0.0
      %335 = vmatmul.mubr.f32.gmra.mrb[0].mxu0 %v265
      %v336 = vpop.f32.mrb[0].mxu0
      %v337 = vadd.f32 %v261, %v336
      %v338 = vpop.f32.mrb[0].mxu0
      %339 = vmatprep.mubr.f32.mxu0 0.0
      %340 = vmatmul.mubr.f32.gmra.mrb[0].mxu0 %v268
      %v341 = vpop.f32.mrb[0].mxu0
      %v342 = vadd.f32 %v261, %v341
      %v343 = vpop.f32.mrb[0].mxu0
      %344 = vdwg.mxu0
      %345 = vst [vmem:[#allocation2] sm:$0xff] %v337
      %346 = vst [vmem:[#allocation2 + $0x8] sm:$0xff] %v342
      %vm347 = vcmask 259072
      %348 = vst.msk [vmem:[#allocation3 + $0xa] sm:$0x3f] %vm347, 0.0
      %v349 = vld [vmem:[%s2] sm:$0xff]
      %v350 = vld [vmem:[%s2 + $0x8] sm:$0xff]
      %v351 = vld [vmem:[%s2 + $0x10] sm:$0xff]
      %v352 = vld [vmem:[%s2 + $0x18] sm:$0xff]
      %v353 = vlaneseq
      %v354 = vand.u32 %v353, 127
      %vm355 = vcmp.ge.s32.totalorder %v354, 64
      %vm356 = vcmp.lt.s32.totalorder %v354, 96
      %vm357 = vmand %vm355, %vm356
      %v358 = vsel %vm357, 1.0, 0.5
      %v359 = vsel %vm357, 0.0, 0.5
      %v360 = vld [vmem:[#allocation2] sm:$0x1]
      %vm361 = vcmask 261120
      %v363 = vsel %vm361, 0.0, 0
      %365 = vmatprep.subr.mxu0 0.0
      %366 = vmatpush1.msra.mxu0 %v349
      %367 = vmatprep.subr.mxu0 0.0
      %368 = vmatpush1.msra.mxu0 %v350
      %369 = vmatprep.subr.mxu0 0.0
      %370 = vmatpush1.msra.mxu0 %v351
      %371 = vmatprep.subr.mxu0 0.0
      %372 = vmatpush1.msra.mxu0 %v352
      %373 = vmatprep.subr.mxu0 0.0
      %374 = vmatpush1.msra.mxu0 0.0
      %375 = vmatprep.subr.mxu0 0.0
      %376 = vmatpush1.msra.mxu0 0.0
      %377 = vmatprep.subr.mxu0 0.0
      %378 = vmatpush1.msra.mxu0 0.0
      %379 = vmatprep.subr.mxu0 0.0
      %380 = vmatpush1.msra.mxu0 0.0
      %381 = vmatprep.subr.mxu0 0.0
      %382 = vmatpush1.msra.mxu0 0.0
      %383 = vmatprep.subr.mxu0 0.0
      %384 = vmatpush1.msra.mxu0 0.0
      %385 = vmatprep.subr.mxu0 0.0
      %386 = vmatpush1.msra.mxu0 0.0
      %387 = vmatprep.subr.mxu0 0.0
      %388 = vmatpush1.msra.mxu0 0.0
      %389 = vmatprep.subr.mxu0 0.0
      %390 = vmatpush1.msra.mxu0 0.0
      %391 = vmatprep.subr.mxu0 0.0
      %392 = vmatpush1.msra.mxu0 0.0
      %393 = vmatprep.subr.mxu0 0.0
      %394 = vmatpush1.msra.mxu0 0.0
      %395 = vmatprep.subr.mxu0 0.0
      %396 = vmatpush1.msra.mxu0 0.0
      %397 = vmatprep.subr.mxu0 0.0
      %398 = vmatpush1.msra.mxu0 0.0
      %399 = vmatprep.subr.mxu0 0.0
      %400 = vmatpush1.msra.mxu0 0.0
      %401 = vmatprep.subr.mxu0 0.0
      %402 = vmatpush1.msra.mxu0 0.0
      %403 = vmatprep.subr.mxu0 0.0
      %404 = vmatpush1.msra.mxu0 0.0
      %405 = vmatprep.subr.mxu0 0.0
      %406 = vmatpush1.msra.mxu0 0.0
      %407 = vmatprep.subr.mxu0 0.0
      %408 = vmatpush1.msra.mxu0 0.0
      %409 = vmatprep.subr.mxu0 0.0
      %410 = vmatpush1.msra.mxu0 0.0
      %411 = vmatprep.subr.mxu0 0.0
      %412 = vmatpush1.msra.mxu0 0.0
      %413 = vmatprep.subr.mxu0 0.0
      %414 = vmatpush1.msra.mxu0 0.0
      %415 = vmatprep.subr.mxu0 0.0
      %416 = vmatpush1.msra.mxu0 0.0
      %417 = vmatprep.subr.mxu0 0.0
      %418 = vmatpush1.msra.mxu0 0.0
      %419 = vmatprep.subr.mxu0 0.0
      %420 = vmatpush1.msra.mxu0 0.0
      %421 = vmatprep.subr.mxu0 0.0
      %422 = vmatpush1.msra.mxu0 0.0
      %423 = vmatprep.subr.mxu0 0.0
      %424 = vmatpush1.msra.mxu0 0.0
      %425 = vmatprep.subr.mxu0 0.0
      %426 = vmatpush1.msra.mxu0 0.0
      %427 = vmatprep.subr.mxu0 0.0
      %428 = vmatpush1.msra.mxu0 0.0
      %429 = vmatprep.mubr.f32.mxu0 0.0
      %430 = vmatmul.mubr.f32.gmra.mrb[0].mxu0 %v363
      %v431 = vpop.f32.mrb[0].mxu0
      %v432 = vadd.f32 0.0, %v431
      %v433 = vpop.f32.mrb[0].mxu0
      %434 = vdwg.mxu0
      %v435 = vadd.f32 %v360, %v432
      %v436 = vmul.f32 %v435, %v358
      %v437 = vtanh.pop %v436
      %v438 = vmul.f32 %v437, %v358
      %v439 = vadd.f32 %v438, %v359
      %v440 = vmul.f32 %v439, 0.0
      %442 = vrot.lane.b32.xlu0 %v439, 64
      %v443 = vpop.permute.xlu0 %442
      %v445 = vmul.f32 %v439, %v443
      %447 = vrot.lane.b32.xlu0 %v445, 32
      %v448 = vpop.permute.xlu0 %447
      %v450 = vadd.f32 %v440, %v448
      %v451 = vtanh.pop %v450
      %453 = vrot.lane.b32.xlu0 %v451, 64
      %v454 = vpop.permute.xlu0 %453
      %v456 = vmul.f32 %v439, %v454
      %458 = vrot.lane.b32.xlu0 %v456, 32
      %v459 = vpop.permute.xlu0 %458
      %vm461 = vcmask 253952
      %462 = vst.msk [vmem:[#allocation3] sm:$0x1] %vm461, %v459
      %v463 = vld [vmem:[#allocation2 + $0x1] sm:$0x1]
      %v464 = vsel %vm361, %v459, 0
      %466 = vmatprep.subr.mxu0 0.0
      %467 = vmatpush1.msra.mxu0 %v349
      %468 = vmatprep.subr.mxu0 0.0
      %469 = vmatpush1.msra.mxu0 %v350
      %470 = vmatprep.subr.mxu0 0.0
      %471 = vmatpush1.msra.mxu0 %v351
      %472 = vmatprep.subr.mxu0 0.0
      %473 = vmatpush1.msra.mxu0 %v352
      %474 = vmatprep.subr.mxu0 0.0
      %475 = vmatpush1.msra.mxu0 0.0
      %476 = vmatprep.subr.mxu0 0.0
      %477 = vmatpush1.msra.mxu0 0.0
      %478 = vmatprep.subr.mxu0 0.0
      %479 = vmatpush1.msra.mxu0 0.0
      %480 = vmatprep.subr.mxu0 0.0
      %481 = vmatpush1.msra.mxu0 0.0
      %482 = vmatprep.subr.mxu0 0.0
      %483 = vmatpush1.msra.mxu0 0.0
      %484 = vmatprep.subr.mxu0 0.0
      %485 = vmatpush1.msra.mxu0 0.0
      %486 = vmatprep.subr.mxu0 0.0
      %487 = vmatpush1.msra.mxu0 0.0
      %488 = vmatprep.subr.mxu0 0.0
      %489 = vmatpush1.msra.mxu0 0.0
      %490 = vmatprep.subr.mxu0 0.0
      %491 = vmatpush1.msra.mxu0 0.0
      %492 = vmatprep.subr.mxu0 0.0
      %493 = vmatpush1.msra.mxu0 0.0
      %494 = vmatprep.subr.mxu0 0.0
      %495 = vmatpush1.msra.mxu0 0.0
      %496 = vmatprep.subr.mxu0 0.0
      %497 = vmatpush1.msra.mxu0 0.0
      %498 = vmatprep.subr.mxu0 0.0
      %499 = vmatpush1.msra.mxu0 0.0
      %500 = vmatprep.subr.mxu0 0.0
      %501 = vmatpush1.msra.mxu0 0.0
      %502 = vmatprep.subr.mxu0 0.0
      %503 = vmatpush1.msra.mxu0 0.0
      %504 = vmatprep.subr.mxu0 0.0
      %505 = vmatpush1.msra.mxu0 0.0
      %506 = vmatprep.subr.mxu0 0.0
      %507 = vmatpush1.msra.mxu0 0.0
      %508 = vmatprep.subr.mxu0 0.0
      %509 = vmatpush1.msra.mxu0 0.0
      %510 = vmatprep.subr.mxu0 0.0
      %511 = vmatpush1.msra.mxu0 0.0
      %512 = vmatprep.subr.mxu0 0.0
      %513 = vmatpush1.msra.mxu0 0.0
      %514 = vmatprep.subr.mxu0 0.0
      %515 = vmatpush1.msra.mxu0 0.0
      %516 = vmatprep.subr.mxu0 0.0
      %517 = vmatpush1.msra.mxu0 0.0
      %518 = vmatprep.subr.mxu0 0.0
      %519 = vmatpush1.msra.mxu0 0.0
      %520 = vmatprep.subr.mxu0 0.0
      %521 = vmatpush1.msra.mxu0 0.0
      %522 = vmatprep.subr.mxu0 0.0
      %523 = vmatpush1.msra.mxu0 0.0
      %524 = vmatprep.subr.mxu0 0.0
      %525 = vmatpush1.msra.mxu0 0.0
      %526 = vmatprep.subr.mxu0 0.0
      %527 = vmatpush1.msra.mxu0 0.0
      %528 = vmatprep.subr.mxu0 0.0
      %529 = vmatpush1.msra.mxu0 0.0
      %530 = vmatprep.mubr.f32.mxu0 0.0
      %531 = vmatmul.mubr.f32.gmra.mrb[0].mxu0 %v464
      %v532 = vpop.f32.mrb[0].mxu0
      %v533 = vadd.f32 0.0, %v532
      %v534 = vpop.f32.mrb[0].mxu0
      %535 = vdwg.mxu0
      %v536 = vadd.f32 %v463, %v533
      %v537 = vmul.f32 %v536, %v358
      %v538 = vtanh.pop %v537
      %v539 = vmul.f32 %v538, %v358
      %v540 = vadd.f32 %v539, %v359
      %v541 = vmul.f32 %v540, %v450
      %543 = vrot.lane.b32.xlu0 %v540, 64
      %v544 = vpop.permute.xlu0 %543
      %v546 = vmul.f32 %v540, %v544
      %548 = vrot.lane.b32.xlu0 %v546, 32
      %v549 = vpop.permute.xlu0 %548
      %v551 = vadd.f32 %v541, %v549
      %v552 = vtanh.pop %v551
      %554 = vrot.lane.b32.xlu0 %v552, 64
      %v555 = vpop.permute.xlu0 %554
      %v557 = vmul.f32 %v540, %v555
      %559 = vrot.lane.b32.xlu0 %v557, 32
      %v560 = vpop.permute.xlu0 %559
      %562 = vst.msk [vmem:[#allocation3 + $0x1] sm:$0x1] %vm461, %v560
      %v563 = vld [vmem:[#allocation2 + $0x2] sm:$0x1]
      %v564 = vsel %vm361, %v560, 0
      %566 = vmatprep.subr.mxu0 0.0
      %567 = vmatpush1.msra.mxu0 %v349
      %568 = vmatprep.subr.mxu0 0.0
      %569 = vmatpush1.msra.mxu0 %v350
      %570 = vmatprep.subr.mxu0 0.0
      %571 = vmatpush1.msra.mxu0 %v351
      %572 = vmatprep.subr.mxu0 0.0
      %573 = vmatpush1.msra.mxu0 %v352
      %574 = vmatprep.subr.mxu0 0.0
      %575 = vmatpush1.msra.mxu0 0.0
      %576 = vmatprep.subr.mxu0 0.0
      %577 = vmatpush1.msra.mxu0 0.0
      %578 = vmatprep.subr.mxu0 0.0
      %579 = vmatpush1.msra.mxu0 0.0
      %580 = vmatprep.subr.mxu0 0.0
      %581 = vmatpush1.msra.mxu0 0.0
      %582 = vmatprep.subr.mxu0 0.0
      %583 = vmatpush1.msra.mxu0 0.0
      %584 = vmatprep.subr.mxu0 0.0
      %585 = vmatpush1.msra.mxu0 0.0
      %586 = vmatprep.subr.mxu0 0.0
      %587 = vmatpush1.msra.mxu0 0.0
      %588 = vmatprep.subr.mxu0 0.0
      %589 = vmatpush1.msra.mxu0 0.0
      %590 = vmatprep.subr.mxu0 0.0
      %591 = vmatpush1.msra.mxu0 0.0
      %592 = vmatprep.subr.mxu0 0.0
      %593 = vmatpush1.msra.mxu0 0.0
      %594 = vmatprep.subr.mxu0 0.0
      %595 = vmatpush1.msra.mxu0 0.0
      %596 = vmatprep.subr.mxu0 0.0
      %597 = vmatpush1.msra.mxu0 0.0
      %598 = vmatprep.subr.mxu0 0.0
      %599 = vmatpush1.msra.mxu0 0.0
      %600 = vmatprep.subr.mxu0 0.0
      %601 = vmatpush1.msra.mxu0 0.0
      %602 = vmatprep.subr.mxu0 0.0
      %603 = vmatpush1.msra.mxu0 0.0
      %604 = vmatprep.subr.mxu0 0.0
      %605 = vmatpush1.msra.mxu0 0.0
      %606 = vmatprep.subr.mxu0 0.0
      %607 = vmatpush1.msra.mxu0 0.0
      %608 = vmatprep.subr.mxu0 0.0
      %609 = vmatpush1.msra.mxu0 0.0
      %610 = vmatprep.subr.mxu0 0.0
      %611 = vmatpush1.msra.mxu0 0.0
      %612 = vmatprep.subr.mxu0 0.0
      %613 = vmatpush1.msra.mxu0 0.0
      %614 = vmatprep.subr.mxu0 0.0
      %615 = vmatpush1.msra.mxu0 0.0
      %616 = vmatprep.subr.mxu0 0.0
      %617 = vmatpush1.msra.mxu0 0.0
      %618 = vmatprep.subr.mxu0 0.0
      %619 = vmatpush1.msra.mxu0 0.0
      %620 = vmatprep.subr.mxu0 0.0
      %621 = vmatpush1.msra.mxu0 0.0
      %622 = vmatprep.subr.mxu0 0.0
      %623 = vmatpush1.msra.mxu0 0.0
      %624 = vmatprep.subr.mxu0 0.0
      %625 = vmatpush1.msra.mxu0 0.0
      %626 = vmatprep.subr.mxu0 0.0
      %627 = vmatpush1.msra.mxu0 0.0
      %628 = vmatprep.subr.mxu0 0.0
      %629 = vmatpush1.msra.mxu0 0.0
      %630 = vmatprep.mubr.f32.mxu0 0.0
      %631 = vmatmul.mubr.f32.gmra.mrb[0].mxu0 %v564
      %v632 = vpop.f32.mrb[0].mxu0
      %v633 = vadd.f32 0.0, %v632
      %v634 = vpop.f32.mrb[0].mxu0
      %635 = vdwg.mxu0
      %v636 = vadd.f32 %v563, %v633
      %v637 = vmul.f32 %v636, %v358
      %v638 = vtanh.pop %v637
      %v639 = vmul.f32 %v638, %v358
      %v640 = vadd.f32 %v639, %v359
      %v641 = vmul.f32 %v640, %v551
      %643 = vrot.lane.b32.xlu0 %v640, 64
      %v644 = vpop.permute.xlu0 %643
      %v646 = vmul.f32 %v640, %v644
      %648 = vrot.lane.b32.xlu0 %v646, 32
      %v649 = vpop.permute.xlu0 %648
      %v651 = vadd.f32 %v641, %v649
      %v652 = vtanh.pop %v651
      %654 = vrot.lane.b32.xlu0 %v652, 64
      %v655 = vpop.permute.xlu0 %654
      %v657 = vmul.f32 %v640, %v655
      %659 = vrot.lane.b32.xlu0 %v657, 32
      %v660 = vpop.permute.xlu0 %659
      %662 = vst.msk [vmem:[#allocation3 + $0x2] sm:$0x1] %vm461, %v660
      %v663 = vld [vmem:[#allocation2 + $0x3] sm:$0x1]
      %v664 = vsel %vm361, %v660, 0
      %666 = vmatprep.subr.mxu0 0.0
      %667 = vmatpush1.msra.mxu0 %v349
      %668 = vmatprep.subr.mxu0 0.0
      %669 = vmatpush1.msra.mxu0 %v350
      %670 = vmatprep.subr.mxu0 0.0
      %671 = vmatpush1.msra.mxu0 %v351
      %672 = vmatprep.subr.mxu0 0.0
      %673 = vmatpush1.msra.mxu0 %v352
      %674 = vmatprep.subr.mxu0 0.0
      %675 = vmatpush1.msra.mxu0 0.0
      %676 = vmatprep.subr.mxu0 0.0
      %677 = vmatpush1.msra.mxu0 0.0
      %678 = vmatprep.subr.mxu0 0.0
      %679 = vmatpush1.msra.mxu0 0.0
      %680 = vmatprep.subr.mxu0 0.0
      %681 = vmatpush1.msra.mxu0 0.0
      %682 = vmatprep.subr.mxu0 0.0
      %683 = vmatpush1.msra.mxu0 0.0
      %684 = vmatprep.subr.mxu0 0.0
      %685 = vmatpush1.msra.mxu0 0.0
      %686 = vmatprep.subr.mxu0 0.0
      %687 = vmatpush1.msra.mxu0 0.0
      %688 = vmatprep.subr.mxu0 0.0
      %689 = vmatpush1.msra.mxu0 0.0
      %690 = vmatprep.subr.mxu0 0.0
      %691 = vmatpush1.msra.mxu0 0.0
      %692 = vmatprep.subr.mxu0 0.0
      %693 = vmatpush1.msra.mxu0 0.0
      %694 = vmatprep.subr.mxu0 0.0
      %695 = vmatpush1.msra.mxu0 0.0
      %696 = vmatprep.subr.mxu0 0.0
      %697 = vmatpush1.msra.mxu0 0.0
      %698 = vmatprep.subr.mxu0 0.0
      %699 = vmatpush1.msra.mxu0 0.0
      %700 = vmatprep.subr.mxu0 0.0
      %701 = vmatpush1.msra.mxu0 0.0
      %702 = vmatprep.subr.mxu0 0.0
      %703 = vmatpush1.msra.mxu0 0.0
      %704 = vmatprep.subr.mxu0 0.0
      %705 = vmatpush1.msra.mxu0 0.0
      %706 = vmatprep.subr.mxu0 0.0
      %707 = vmatpush1.msra.mxu0 0.0
      %708 = vmatprep.subr.mxu0 0.0
      %709 = vmatpush1.msra.mxu0 0.0
      %710 = vmatprep.subr.mxu0 0.0
      %711 = vmatpush1.msra.mxu0 0.0
      %712 = vmatprep.subr.mxu0 0.0
      %713 = vmatpush1.msra.mxu0 0.0
      %714 = vmatprep.subr.mxu0 0.0
      %715 = vmatpush1.msra.mxu0 0.0
      %716 = vmatprep.subr.mxu0 0.0
      %717 = vmatpush1.msra.mxu0 0.0
      %718 = vmatprep.subr.mxu0 0.0
      %719 = vmatpush1.msra.mxu0 0.0
      %720 = vmatprep.subr.mxu0 0.0
      %721 = vmatpush1.msra.mxu0 0.0
      %722 = vmatprep.subr.mxu0 0.0
      %723 = vmatpush1.msra.mxu0 0.0
      %724 = vmatprep.subr.mxu0 0.0
      %725 = vmatpush1.msra.mxu0 0.0
      %726 = vmatprep.subr.mxu0 0.0
      %727 = vmatpush1.msra.mxu0 0.0
      %728 = vmatprep.subr.mxu0 0.0
      %729 = vmatpush1.msra.mxu0 0.0
      %730 = vmatprep.mubr.f32.mxu0 0.0
      %731 = vmatmul.mubr.f32.gmra.mrb[0].mxu0 %v664
      %v732 = vpop.f32.mrb[0].mxu0
      %v733 = vadd.f32 0.0, %v732
      %v734 = vpop.f32.mrb[0].mxu0
      %735 = vdwg.mxu0
      %v736 = vadd.f32 %v663, %v733
      %v737 = vmul.f32 %v736, %v358
      %v738 = vtanh.pop %v737
      %v739 = vmul.f32 %v738, %v358
      %v740 = vadd.f32 %v739, %v359
      %v741 = vmul.f32 %v740, %v651
      %743 = vrot.lane.b32.xlu0 %v740, 64
      %v744 = vpop.permute.xlu0 %743
      %v746 = vmul.f32 %v740, %v744
      %748 = vrot.lane.b32.xlu0 %v746, 32
      %v749 = vpop.permute.xlu0 %748
      %v751 = vadd.f32 %v741, %v749
      %v752 = vtanh.pop %v751
      %754 = vrot.lane.b32.xlu0 %v752, 64
      %v755 = vpop.permute.xlu0 %754
      %v757 = vmul.f32 %v740, %v755
      %759 = vrot.lane.b32.xlu0 %v757, 32
      %v760 = vpop.permute.xlu0 %759
      %762 = vst.msk [vmem:[#allocation3 + $0x3] sm:$0x1] %vm461, %v760
      %v763 = vld [vmem:[#allocation2 + $0x4] sm:$0x1]
      %v764 = vsel %vm361, %v760, 0
      %766 = vmatprep.subr.mxu0 0.0
      %767 = vmatpush1.msra.mxu0 %v349
      %768 = vmatprep.subr.mxu0 0.0
      %769 = vmatpush1.msra.mxu0 %v350
      %770 = vmatprep.subr.mxu0 0.0
      %771 = vmatpush1.msra.mxu0 %v351
      %772 = vmatprep.subr.mxu0 0.0
      %773 = vmatpush1.msra.mxu0 %v352
      %774 = vmatprep.subr.mxu0 0.0
      %775 = vmatpush1.msra.mxu0 0.0
      %776 = vmatprep.subr.mxu0 0.0
      %777 = vmatpush1.msra.mxu0 0.0
      %778 = vmatprep.subr.mxu0 0.0
      %779 = vmatpush1.msra.mxu0 0.0
      %780 = vmatprep.subr.mxu0 0.0
      %781 = vmatpush1.msra.mxu0 0.0
      %782 = vmatprep.subr.mxu0 0.0
      %783 = vmatpush1.msra.mxu0 0.0
      %784 = vmatprep.subr.mxu0 0.0
      %785 = vmatpush1.msra.mxu0 0.0
      %786 = vmatprep.subr.mxu0 0.0
      %787 = vmatpush1.msra.mxu0 0.0
      %788 = vmatprep.subr.mxu0 0.0
      %789 = vmatpush1.msra.mxu0 0.0
      %790 = vmatprep.subr.mxu0 0.0
      %791 = vmatpush1.msra.mxu0 0.0
      %792 = vmatprep.subr.mxu0 0.0
      %793 = vmatpush1.msra.mxu0 0.0
      %794 = vmatprep.subr.mxu0 0.0
      %795 = vmatpush1.msra.mxu0 0.0
      %796 = vmatprep.subr.mxu0 0.0
      %797 = vmatpush1.msra.mxu0 0.0
      %798 = vmatprep.subr.mxu0 0.0
      %799 = vmatpush1.msra.mxu0 0.0
      %800 = vmatprep.subr.mxu0 0.0
      %801 = vmatpush1.msra.mxu0 0.0
      %802 = vmatprep.subr.mxu0 0.0
      %803 = vmatpush1.msra.mxu0 0.0
      %804 = vmatprep.subr.mxu0 0.0
      %805 = vmatpush1.msra.mxu0 0.0
      %806 = vmatprep.subr.mxu0 0.0
      %807 = vmatpush1.msra.mxu0 0.0
      %808 = vmatprep.subr.mxu0 0.0
      %809 = vmatpush1.msra.mxu0 0.0
      %810 = vmatprep.subr.mxu0 0.0
      %811 = vmatpush1.msra.mxu0 0.0
      %812 = vmatprep.subr.mxu0 0.0
      %813 = vmatpush1.msra.mxu0 0.0
      %814 = vmatprep.subr.mxu0 0.0
      %815 = vmatpush1.msra.mxu0 0.0
      %816 = vmatprep.subr.mxu0 0.0
      %817 = vmatpush1.msra.mxu0 0.0
      %818 = vmatprep.subr.mxu0 0.0
      %819 = vmatpush1.msra.mxu0 0.0
      %820 = vmatprep.subr.mxu0 0.0
      %821 = vmatpush1.msra.mxu0 0.0
      %822 = vmatprep.subr.mxu0 0.0
      %823 = vmatpush1.msra.mxu0 0.0
      %824 = vmatprep.subr.mxu0 0.0
      %825 = vmatpush1.msra.mxu0 0.0
      %826 = vmatprep.subr.mxu0 0.0
      %827 = vmatpush1.msra.mxu0 0.0
      %828 = vmatprep.subr.mxu0 0.0
      %829 = vmatpush1.msra.mxu0 0.0
      %830 = vmatprep.mubr.f32.mxu0 0.0
      %831 = vmatmul.mubr.f32.gmra.mrb[0].mxu0 %v764
      %v832 = vpop.f32.mrb[0].mxu0
      %v833 = vadd.f32 0.0, %v832
      %v834 = vpop.f32.mrb[0].mxu0
      %835 = vdwg.mxu0
      %v836 = vadd.f32 %v763, %v833
      %v837 = vmul.f32 %v836, %v358
      %v838 = vtanh.pop %v837
      %v839 = vmul.f32 %v838, %v358
      %v840 = vadd.f32 %v839, %v359
      %v841 = vmul.f32 %v840, %v751
      %843 = vrot.lane.b32.xlu0 %v840, 64
      %v844 = vpop.permute.xlu0 %843
      %v846 = vmul.f32 %v840, %v844
      %848 = vrot.lane.b32.xlu0 %v846, 32
      %v849 = vpop.permute.xlu0 %848
      %v851 = vadd.f32 %v841, %v849
      %v852 = vtanh.pop %v851
      %854 = vrot.lane.b32.xlu0 %v852, 64
      %v855 = vpop.permute.xlu0 %854
      %v857 = vmul.f32 %v840, %v855
      %859 = vrot.lane.b32.xlu0 %v857, 32
      %v860 = vpop.permute.xlu0 %859
      %862 = vst.msk [vmem:[#allocation3 + $0x4] sm:$0x1] %vm461, %v860
      %v863 = vld [vmem:[#allocation2 + $0x5] sm:$0x1]
      %v864 = vsel %vm361, %v860, 0
      %866 = vmatprep.subr.mxu0 0.0
      %867 = vmatpush1.msra.mxu0 %v349
      %868 = vmatprep.subr.mxu0 0.0
      %869 = vmatpush1.msra.mxu0 %v350
      %870 = vmatprep.subr.mxu0 0.0
      %871 = vmatpush1.msra.mxu0 %v351
      %872 = vmatprep.subr.mxu0 0.0
      %873 = vmatpush1.msra.mxu0 %v352
      %874 = vmatprep.subr.mxu0 0.0
      %875 = vmatpush1.msra.mxu0 0.0
      %876 = vmatprep.subr.mxu0 0.0
      %877 = vmatpush1.msra.mxu0 0.0
      %878 = vmatprep.subr.mxu0 0.0
      %879 = vmatpush1.msra.mxu0 0.0
      %880 = vmatprep.subr.mxu0 0.0
      %881 = vmatpush1.msra.mxu0 0.0
      %882 = vmatprep.subr.mxu0 0.0
      %883 = vmatpush1.msra.mxu0 0.0
      %884 = vmatprep.subr.mxu0 0.0
      %885 = vmatpush1.msra.mxu0 0.0
      %886 = vmatprep.subr.mxu0 0.0
      %887 = vmatpush1.msra.mxu0 0.0
      %888 = vmatprep.subr.mxu0 0.0
      %889 = vmatpush1.msra.mxu0 0.0
      %890 = vmatprep.subr.mxu0 0.0
      %891 = vmatpush1.msra.mxu0 0.0
      %892 = vmatprep.subr.mxu0 0.0
      %893 = vmatpush1.msra.mxu0 0.0
      %894 = vmatprep.subr.mxu0 0.0
      %895 = vmatpush1.msra.mxu0 0.0
      %896 = vmatprep.subr.mxu0 0.0
      %897 = vmatpush1.msra.mxu0 0.0
      %898 = vmatprep.subr.mxu0 0.0
      %899 = vmatpush1.msra.mxu0 0.0
      %900 = vmatprep.subr.mxu0 0.0
      %901 = vmatpush1.msra.mxu0 0.0
      %902 = vmatprep.subr.mxu0 0.0
      %903 = vmatpush1.msra.mxu0 0.0
      %904 = vmatprep.subr.mxu0 0.0
      %905 = vmatpush1.msra.mxu0 0.0
      %906 = vmatprep.subr.mxu0 0.0
      %907 = vmatpush1.msra.mxu0 0.0
      %908 = vmatprep.subr.mxu0 0.0
      %909 = vmatpush1.msra.mxu0 0.0
      %910 = vmatprep.subr.mxu0 0.0
      %911 = vmatpush1.msra.mxu0 0.0
      %912 = vmatprep.subr.mxu0 0.0
      %913 = vmatpush1.msra.mxu0 0.0
      %914 = vmatprep.subr.mxu0 0.0
      %915 = vmatpush1.msra.mxu0 0.0
      %916 = vmatprep.subr.mxu0 0.0
      %917 = vmatpush1.msra.mxu0 0.0
      %918 = vmatprep.subr.mxu0 0.0
      %919 = vmatpush1.msra.mxu0 0.0
      %920 = vmatprep.subr.mxu0 0.0
      %921 = vmatpush1.msra.mxu0 0.0
      %922 = vmatprep.subr.mxu0 0.0
      %923 = vmatpush1.msra.mxu0 0.0
      %924 = vmatprep.subr.mxu0 0.0
      %925 = vmatpush1.msra.mxu0 0.0
      %926 = vmatprep.subr.mxu0 0.0
      %927 = vmatpush1.msra.mxu0 0.0
      %928 = vmatprep.subr.mxu0 0.0
      %929 = vmatpush1.msra.mxu0 0.0
      %930 = vmatprep.mubr.f32.mxu0 0.0
      %931 = vmatmul.mubr.f32.gmra.mrb[0].mxu0 %v864
      %v932 = vpop.f32.mrb[0].mxu0
      %v933 = vadd.f32 0.0, %v932
      %v934 = vpop.f32.mrb[0].mxu0
      %935 = vdwg.mxu0
      %v936 = vadd.f32 %v863, %v933
      %v937 = vmul.f32 %v936, %v358
      %v938 = vtanh.pop %v937
      %v939 = vmul.f32 %v938, %v358
      %v940 = vadd.f32 %v939, %v359
      %v941 = vmul.f32 %v940, %v851
      %943 = vrot.lane.b32.xlu0 %v940, 64
      %v944 = vpop.permute.xlu0 %943
      %v946 = vmul.f32 %v940, %v944
      %948 = vrot.lane.b32.xlu0 %v946, 32
      %v949 = vpop.permute.xlu0 %948
      %v951 = vadd.f32 %v941, %v949
      %v952 = vtanh.pop %v951
      %954 = vrot.lane.b32.xlu0 %v952, 64
      %v955 = vpop.permute.xlu0 %954
      %v957 = vmul.f32 %v940, %v955
      %959 = vrot.lane.b32.xlu0 %v957, 32
      %v960 = vpop.permute.xlu0 %959
      %962 = vst.msk [vmem:[#allocation3 + $0x5] sm:$0x1] %vm461, %v960
      %v963 = vld [vmem:[#allocation2 + $0x6] sm:$0x1]
      %v964 = vsel %vm361, %v960, 0
      %966 = vmatprep.subr.mxu0 0.0
      %967 = vmatpush1.msra.mxu0 %v349
      %968 = vmatprep.subr.mxu0 0.0
      %969 = vmatpush1.msra.mxu0 %v350
      %970 = vmatprep.subr.mxu0 0.0
      %971 = vmatpush1.msra.mxu0 %v351
      %972 = vmatprep.subr.mxu0 0.0
      %973 = vmatpush1.msra.mxu0 %v352
      %974 = vmatprep.subr.mxu0 0.0
      %975 = vmatpush1.msra.mxu0 0.0
      %976 = vmatprep.subr.mxu0 0.0
      %977 = vmatpush1.msra.mxu0 0.0
      %978 = vmatprep.subr.mxu0 0.0
      %979 = vmatpush1.msra.mxu0 0.0
      %980 = vmatprep.subr.mxu0 0.0
      %981 = vmatpush1.msra.mxu0 0.0
      %982 = vmatprep.subr.mxu0 0.0
      %983 = vmatpush1.msra.mxu0 0.0
      %984 = vmatprep.subr.mxu0 0.0
      %985 = vmatpush1.msra.mxu0 0.0
      %986 = vmatprep.subr.mxu0 0.0
      %987 = vmatpush1.msra.mxu0 0.0
      %988 = vmatprep.subr.mxu0 0.0
      %989 = vmatpush1.msra.mxu0 0.0
      %990 = vmatprep.subr.mxu0 0.0
      %991 = vmatpush1.msra.mxu0 0.0
      %992 = vmatprep.subr.mxu0 0.0
      %993 = vmatpush1.msra.mxu0 0.0
      %994 = vmatprep.subr.mxu0 0.0
      %995 = vmatpush1.msra.mxu0 0.0
      %996 = vmatprep.subr.mxu0 0.0
      %997 = vmatpush1.msra.mxu0 0.0
      %998 = vmatprep.subr.mxu0 0.0
      %999 = vmatpush1.msra.mxu0 0.0
      %1000 = vmatprep.subr.mxu0 0.0
      %1001 = vmatpush1.msra.mxu0 0.0
      %1002 = vmatprep.subr.mxu0 0.0
      %1003 = vmatpush1.msra.mxu0 0.0
      %1004 = vmatprep.subr.mxu0 0.0
      %1005 = vmatpush1.msra.mxu0 0.0
      %1006 = vmatprep.subr.mxu0 0.0
      %1007 = vmatpush1.msra.mxu0 0.0
      %1008 = vmatprep.subr.mxu0 0.0
      %1009 = vmatpush1.msra.mxu0 0.0
      %1010 = vmatprep.subr.mxu0 0.0
      %1011 = vmatpush1.msra.mxu0 0.0
      %1012 = vmatprep.subr.mxu0 0.0
      %1013 = vmatpush1.msra.mxu0 0.0
      %1014 = vmatprep.subr.mxu0 0.0
      %1015 = vmatpush1.msra.mxu0 0.0
      %1016 = vmatprep.subr.mxu0 0.0
      %1017 = vmatpush1.msra.mxu0 0.0
      %1018 = vmatprep.subr.mxu0 0.0
      %1019 = vmatpush1.msra.mxu0 0.0
      %1020 = vmatprep.subr.mxu0 0.0
      %1021 = vmatpush1.msra.mxu0 0.0
      %1022 = vmatprep.subr.mxu0 0.0
      %1023 = vmatpush1.msra.mxu0 0.0
      %1024 = vmatprep.subr.mxu0 0.0
      %1025 = vmatpush1.msra.mxu0 0.0
      %1026 = vmatprep.subr.mxu0 0.0
      %1027 = vmatpush1.msra.mxu0 0.0
      %1028 = vmatprep.subr.mxu0 0.0
      %1029 = vmatpush1.msra.mxu0 0.0
      %1030 = vmatprep.mubr.f32.mxu0 0.0
      %1031 = vmatmul.mubr.f32.gmra.mrb[0].mxu0 %v964
      %v1032 = vpop.f32.mrb[0].mxu0
      %v1033 = vadd.f32 0.0, %v1032
      %v1034 = vpop.f32.mrb[0].mxu0
      %1035 = vdwg.mxu0
      %v1036 = vadd.f32 %v963, %v1033
      %v1037 = vmul.f32 %v1036, %v358
      %v1038 = vtanh.pop %v1037
      %v1039 = vmul.f32 %v1038, %v358
      %v1040 = vadd.f32 %v1039, %v359
      %v1041 = vmul.f32 %v1040, %v951
      %1043 = vrot.lane.b32.xlu0 %v1040, 64
      %v1044 = vpop.permute.xlu0 %1043
      %v1046 = vmul.f32 %v1040, %v1044
      %1048 = vrot.lane.b32.xlu0 %v1046, 32
      %v1049 = vpop.permute.xlu0 %1048
      %v1051 = vadd.f32 %v1041, %v1049
      %v1052 = vtanh.pop %v1051
      %1054 = vrot.lane.b32.xlu0 %v1052, 64
      %v1055 = vpop.permute.xlu0 %1054
      %v1057 = vmul.f32 %v1040, %v1055
      %1059 = vrot.lane.b32.xlu0 %v1057, 32
      %v1060 = vpop.permute.xlu0 %1059
      %1062 = vst.msk [vmem:[#allocation3 + $0x6] sm:$0x1] %vm461, %v1060
      %v1063 = vld [vmem:[#allocation2 + $0x7] sm:$0x1]
      %v1064 = vsel %vm361, %v1060, 0
      %1066 = vmatprep.subr.mxu0 0.0
      %1067 = vmatpush1.msra.mxu0 %v349
      %1068 = vmatprep.subr.mxu0 0.0
      %1069 = vmatpush1.msra.mxu0 %v350
      %1070 = vmatprep.subr.mxu0 0.0
      %1071 = vmatpush1.msra.mxu0 %v351
      %1072 = vmatprep.subr.mxu0 0.0
      %1073 = vmatpush1.msra.mxu0 %v352
      %1074 = vmatprep.subr.mxu0 0.0
      %1075 = vmatpush1.msra.mxu0 0.0
      %1076 = vmatprep.subr.mxu0 0.0
      %1077 = vmatpush1.msra.mxu0 0.0
      %1078 = vmatprep.subr.mxu0 0.0
      %1079 = vmatpush1.msra.mxu0 0.0
      %1080 = vmatprep.subr.mxu0 0.0
      %1081 = vmatpush1.msra.mxu0 0.0
      %1082 = vmatprep.subr.mxu0 0.0
      %1083 = vmatpush1.msra.mxu0 0.0
      %1084 = vmatprep.subr.mxu0 0.0
      %1085 = vmatpush1.msra.mxu0 0.0
      %1086 = vmatprep.subr.mxu0 0.0
      %1087 = vmatpush1.msra.mxu0 0.0
      %1088 = vmatprep.subr.mxu0 0.0
      %1089 = vmatpush1.msra.mxu0 0.0
      %1090 = vmatprep.subr.mxu0 0.0
      %1091 = vmatpush1.msra.mxu0 0.0
      %1092 = vmatprep.subr.mxu0 0.0
      %1093 = vmatpush1.msra.mxu0 0.0
      %1094 = vmatprep.subr.mxu0 0.0
      %1095 = vmatpush1.msra.mxu0 0.0
      %1096 = vmatprep.subr.mxu0 0.0
      %1097 = vmatpush1.msra.mxu0 0.0
      %1098 = vmatprep.subr.mxu0 0.0
      %1099 = vmatpush1.msra.mxu0 0.0
      %1100 = vmatprep.subr.mxu0 0.0
      %1101 = vmatpush1.msra.mxu0 0.0
      %1102 = vmatprep.subr.mxu0 0.0
      %1103 = vmatpush1.msra.mxu0 0.0
      %1104 = vmatprep.subr.mxu0 0.0
      %1105 = vmatpush1.msra.mxu0 0.0
      %1106 = vmatprep.subr.mxu0 0.0
      %1107 = vmatpush1.msra.mxu0 0.0
      %1108 = vmatprep.subr.mxu0 0.0
      %1109 = vmatpush1.msra.mxu0 0.0
      %1110 = vmatprep.subr.mxu0 0.0
      %1111 = vmatpush1.msra.mxu0 0.0
      %1112 = vmatprep.subr.mxu0 0.0
      %1113 = vmatpush1.msra.mxu0 0.0
      %1114 = vmatprep.subr.mxu0 0.0
      %1115 = vmatpush1.msra.mxu0 0.0
      %1116 = vmatprep.subr.mxu0 0.0
      %1117 = vmatpush1.msra.mxu0 0.0
      %1118 = vmatprep.subr.mxu0 0.0
      %1119 = vmatpush1.msra.mxu0 0.0
      %1120 = vmatprep.subr.mxu0 0.0
      %1121 = vmatpush1.msra.mxu0 0.0
      %1122 = vmatprep.subr.mxu0 0.0
      %1123 = vmatpush1.msra.mxu0 0.0
      %1124 = vmatprep.subr.mxu0 0.0
      %1125 = vmatpush1.msra.mxu0 0.0
      %1126 = vmatprep.subr.mxu0 0.0
      %1127 = vmatpush1.msra.mxu0 0.0
      %1128 = vmatprep.subr.mxu0 0.0
      %1129 = vmatpush1.msra.mxu0 0.0
      %1130 = vmatprep.mubr.f32.mxu0 0.0
      %1131 = vmatmul.mubr.f32.gmra.mrb[0].mxu0 %v1064
      %v1132 = vpop.f32.mrb[0].mxu0
      %v1133 = vadd.f32 0.0, %v1132
      %v1134 = vpop.f32.mrb[0].mxu0
      %1135 = vdwg.mxu0
      %v1136 = vadd.f32 %v1063, %v1133
      %v1137 = vmul.f32 %v1136, %v358
      %v1138 = vtanh.pop %v1137
      %v1139 = vmul.f32 %v1138, %v358
      %v1140 = vadd.f32 %v1139, %v359
      %v1141 = vmul.f32 %v1140, %v1051
      %1143 = vrot.lane.b32.xlu0 %v1140, 64
      %v1144 = vpop.permute.xlu0 %1143
      %v1146 = vmul.f32 %v1140, %v1144
      %1148 = vrot.lane.b32.xlu0 %v1146, 32
      %v1149 = vpop.permute.xlu0 %1148
      %v1151 = vadd.f32 %v1141, %v1149
      %v1152 = vtanh.pop %v1151
      %1154 = vrot.lane.b32.xlu0 %v1152, 64
      %v1155 = vpop.permute.xlu0 %1154
      %v1157 = vmul.f32 %v1140, %v1155
      %1159 = vrot.lane.b32.xlu0 %v1157, 32
      %v1160 = vpop.permute.xlu0 %1159
      %1162 = vst.msk [vmem:[#allocation3 + $0x7] sm:$0x1] %vm461, %v1160
      %v1163 = vld [vmem:[#allocation2 + $0x8] sm:$0x1]
      %v1164 = vsel %vm361, %v1160, 0
      %1166 = vmatprep.subr.mxu0 0.0
      %1167 = vmatpush1.msra.mxu0 %v349
      %1168 = vmatprep.subr.mxu0 0.0
      %1169 = vmatpush1.msra.mxu0 %v350
      %1170 = vmatprep.subr.mxu0 0.0
      %1171 = vmatpush1.msra.mxu0 %v351
      %1172 = vmatprep.subr.mxu0 0.0
      %1173 = vmatpush1.msra.mxu0 %v352
      %1174 = vmatprep.subr.mxu0 0.0
      %1175 = vmatpush1.msra.mxu0 0.0
      %1176 = vmatprep.subr.mxu0 0.0
      %1177 = vmatpush1.msra.mxu0 0.0
      %1178 = vmatprep.subr.mxu0 0.0
      %1179 = vmatpush1.msra.mxu0 0.0
      %1180 = vmatprep.subr.mxu0 0.0
      %1181 = vmatpush1.msra.mxu0 0.0
      %1182 = vmatprep.subr.mxu0 0.0
      %1183 = vmatpush1.msra.mxu0 0.0
      %1184 = vmatprep.subr.mxu0 0.0
      %1185 = vmatpush1.msra.mxu0 0.0
      %1186 = vmatprep.subr.mxu0 0.0
      %1187 = vmatpush1.msra.mxu0 0.0
      %1188 = vmatprep.subr.mxu0 0.0
      %1189 = vmatpush1.msra.mxu0 0.0
      %1190 = vmatprep.subr.mxu0 0.0
      %1191 = vmatpush1.msra.mxu0 0.0
      %1192 = vmatprep.subr.mxu0 0.0
      %1193 = vmatpush1.msra.mxu0 0.0
      %1194 = vmatprep.subr.mxu0 0.0
      %1195 = vmatpush1.msra.mxu0 0.0
      %1196 = vmatprep.subr.mxu0 0.0
      %1197 = vmatpush1.msra.mxu0 0.0
      %1198 = vmatprep.subr.mxu0 0.0
      %1199 = vmatpush1.msra.mxu0 0.0
      %1200 = vmatprep.subr.mxu0 0.0
      %1201 = vmatpush1.msra.mxu0 0.0
      %1202 = vmatprep.subr.mxu0 0.0
      %1203 = vmatpush1.msra.mxu0 0.0
      %1204 = vmatprep.subr.mxu0 0.0
      %1205 = vmatpush1.msra.mxu0 0.0
      %1206 = vmatprep.subr.mxu0 0.0
      %1207 = vmatpush1.msra.mxu0 0.0
      %1208 = vmatprep.subr.mxu0 0.0
      %1209 = vmatpush1.msra.mxu0 0.0
      %1210 = vmatprep.subr.mxu0 0.0
      %1211 = vmatpush1.msra.mxu0 0.0
      %1212 = vmatprep.subr.mxu0 0.0
      %1213 = vmatpush1.msra.mxu0 0.0
      %1214 = vmatprep.subr.mxu0 0.0
      %1215 = vmatpush1.msra.mxu0 0.0
      %1216 = vmatprep.subr.mxu0 0.0
      %1217 = vmatpush1.msra.mxu0 0.0
      %1218 = vmatprep.subr.mxu0 0.0
      %1219 = vmatpush1.msra.mxu0 0.0
      %1220 = vmatprep.subr.mxu0 0.0
      %1221 = vmatpush1.msra.mxu0 0.0
      %1222 = vmatprep.subr.mxu0 0.0
      %1223 = vmatpush1.msra.mxu0 0.0
      %1224 = vmatprep.subr.mxu0 0.0
      %1225 = vmatpush1.msra.mxu0 0.0
      %1226 = vmatprep.subr.mxu0 0.0
      %1227 = vmatpush1.msra.mxu0 0.0
      %1228 = vmatprep.subr.mxu0 0.0
      %1229 = vmatpush1.msra.mxu0 0.0
      %1230 = vmatprep.mubr.f32.mxu0 0.0
      %1231 = vmatmul.mubr.f32.gmra.mrb[0].mxu0 %v1164
      %v1232 = vpop.f32.mrb[0].mxu0
      %v1233 = vadd.f32 0.0, %v1232
      %v1234 = vpop.f32.mrb[0].mxu0
      %1235 = vdwg.mxu0
      %v1236 = vadd.f32 %v1163, %v1233
      %v1237 = vmul.f32 %v1236, %v358
      %v1238 = vtanh.pop %v1237
      %v1239 = vmul.f32 %v1238, %v358
      %v1240 = vadd.f32 %v1239, %v359
      %v1241 = vmul.f32 %v1240, %v1151
      %1243 = vrot.lane.b32.xlu0 %v1240, 64
      %v1244 = vpop.permute.xlu0 %1243
      %v1246 = vmul.f32 %v1240, %v1244
      %1248 = vrot.lane.b32.xlu0 %v1246, 32
      %v1249 = vpop.permute.xlu0 %1248
      %v1251 = vadd.f32 %v1241, %v1249
      %v1252 = vtanh.pop %v1251
      %1254 = vrot.lane.b32.xlu0 %v1252, 64
      %v1255 = vpop.permute.xlu0 %1254
      %v1257 = vmul.f32 %v1240, %v1255
      %1259 = vrot.lane.b32.xlu0 %v1257, 32
      %v1260 = vpop.permute.xlu0 %1259
      %1262 = vst.msk [vmem:[#allocation3 + $0x8] sm:$0x1] %vm461, %v1260
      %v1263 = vld [vmem:[#allocation2 + $0x9] sm:$0x1]
      %v1264 = vsel %vm361, %v1260, 0
      %1266 = vmatprep.subr.mxu0 0.0
      %1267 = vmatpush1.msra.mxu0 %v349
      %1268 = vmatprep.subr.mxu0 0.0
      %1269 = vmatpush1.msra.mxu0 %v350
      %1270 = vmatprep.subr.mxu0 0.0
      %1271 = vmatpush1.msra.mxu0 %v351
      %1272 = vmatprep.subr.mxu0 0.0
      %1273 = vmatpush1.msra.mxu0 %v352
      %1274 = vmatprep.subr.mxu0 0.0
      %1275 = vmatpush1.msra.mxu0 0.0
      %1276 = vmatprep.subr.mxu0 0.0
      %1277 = vmatpush1.msra.mxu0 0.0
      %1278 = vmatprep.subr.mxu0 0.0
      %1279 = vmatpush1.msra.mxu0 0.0
      %1280 = vmatprep.subr.mxu0 0.0
      %1281 = vmatpush1.msra.mxu0 0.0
      %1282 = vmatprep.subr.mxu0 0.0
      %1283 = vmatpush1.msra.mxu0 0.0
      %1284 = vmatprep.subr.mxu0 0.0
      %1285 = vmatpush1.msra.mxu0 0.0
      %1286 = vmatprep.subr.mxu0 0.0
      %1287 = vmatpush1.msra.mxu0 0.0
      %1288 = vmatprep.subr.mxu0 0.0
      %1289 = vmatpush1.msra.mxu0 0.0
      %1290 = vmatprep.subr.mxu0 0.0
      %1291 = vmatpush1.msra.mxu0 0.0
      %1292 = vmatprep.subr.mxu0 0.0
      %1293 = vmatpush1.msra.mxu0 0.0
      %1294 = vmatprep.subr.mxu0 0.0
      %1295 = vmatpush1.msra.mxu0 0.0
      %1296 = vmatprep.subr.mxu0 0.0
      %1297 = vmatpush1.msra.mxu0 0.0
      %1298 = vmatprep.subr.mxu0 0.0
      %1299 = vmatpush1.msra.mxu0 0.0
      %1300 = vmatprep.subr.mxu0 0.0
      %1301 = vmatpush1.msra.mxu0 0.0
      %1302 = vmatprep.subr.mxu0 0.0
      %1303 = vmatpush1.msra.mxu0 0.0
      %1304 = vmatprep.subr.mxu0 0.0
      %1305 = vmatpush1.msra.mxu0 0.0
      %1306 = vmatprep.subr.mxu0 0.0
      %1307 = vmatpush1.msra.mxu0 0.0
      %1308 = vmatprep.subr.mxu0 0.0
      %1309 = vmatpush1.msra.mxu0 0.0
      %1310 = vmatprep.subr.mxu0 0.0
      %1311 = vmatpush1.msra.mxu0 0.0
      %1312 = vmatprep.subr.mxu0 0.0
      %1313 = vmatpush1.msra.mxu0 0.0
      %1314 = vmatprep.subr.mxu0 0.0
      %1315 = vmatpush1.msra.mxu0 0.0
      %1316 = vmatprep.subr.mxu0 0.0
      %1317 = vmatpush1.msra.mxu0 0.0
      %1318 = vmatprep.subr.mxu0 0.0
      %1319 = vmatpush1.msra.mxu0 0.0
      %1320 = vmatprep.subr.mxu0 0.0
      %1321 = vmatpush1.msra.mxu0 0.0
      %1322 = vmatprep.subr.mxu0 0.0
      %1323 = vmatpush1.msra.mxu0 0.0
      %1324 = vmatprep.subr.mxu0 0.0
      %1325 = vmatpush1.msra.mxu0 0.0
      %1326 = vmatprep.subr.mxu0 0.0
      %1327 = vmatpush1.msra.mxu0 0.0
      %1328 = vmatprep.subr.mxu0 0.0
      %1329 = vmatpush1.msra.mxu0 0.0
      %1330 = vmatprep.mubr.f32.mxu0 0.0
      %1331 = vmatmul.mubr.f32.gmra.mrb[0].mxu0 %v1264
      %v1332 = vpop.f32.mrb[0].mxu0
      %v1333 = vadd.f32 0.0, %v1332
      %v1334 = vpop.f32.mrb[0].mxu0
      %1335 = vdwg.mxu0
      %v1336 = vadd.f32 %v1263, %v1333
      %v1337 = vmul.f32 %v1336, %v358
      %v1338 = vtanh.pop %v1337
      %v1339 = vmul.f32 %v1338, %v358
      %v1340 = vadd.f32 %v1339, %v359
      %v1341 = vmul.f32 %v1340, %v1251
      %1343 = vrot.lane.b32.xlu0 %v1340, 64
      %v1344 = vpop.permute.xlu0 %1343
      %v1346 = vmul.f32 %v1340, %v1344
      %1348 = vrot.lane.b32.xlu0 %v1346, 32
      %v1349 = vpop.permute.xlu0 %1348
      %v1351 = vadd.f32 %v1341, %v1349
      %v1352 = vtanh.pop %v1351
      %1354 = vrot.lane.b32.xlu0 %v1352, 64
      %v1355 = vpop.permute.xlu0 %1354
      %v1357 = vmul.f32 %v1340, %v1355
      %1359 = vrot.lane.b32.xlu0 %v1357, 32
      %v1360 = vpop.permute.xlu0 %1359
      %1362 = vst.msk [vmem:[#allocation3 + $0x9] sm:$0x1] %vm461, %v1360
      %v1363 = vld [vmem:[#allocation3] sm:$0xff]
      %v1364 = vld [vmem:[#allocation3 + $0x8] sm:$0xff]
      %v1365 = vld [vmem:[%s4] sm:$0xff]
      %v1366 = vld [vmem:[%s4 + $0x8] sm:$0xff]
      %v1367 = vld [vmem:[%s4 + $0x10] sm:$0xff]
      %v1368 = vld [vmem:[%s4 + $0x18] sm:$0xff]
      %v1369 = vld [vmem:[%s5] sm:$0x1]
      %v1371 = vlaneseq
      %v1372 = vshrl.u32 %v1371, 7
      %v1373 = vsub.s32 0, %v1372
      %v1374 = vrot.slane %v1369, %v1373
      %v1377 = vsel %vm361, %v1363, 0
      %v1380 = vsel %vm361, %v1364, 0
      %1382 = vmatprep.subr.mxu0 0.0
      %1383 = vmatpush1.msra.mxu0 %v1365
      %1384 = vmatprep.subr.mxu0 0.0
      %1385 = vmatpush1.msra.mxu0 %v1366
      %1386 = vmatprep.subr.mxu0 0.0
      %1387 = vmatpush1.msra.mxu0 %v1367
      %1388 = vmatprep.subr.mxu0 0.0
      %1389 = vmatpush1.msra.mxu0 %v1368
      %1390 = vmatprep.subr.mxu0 0.0
      %1391 = vmatpush1.msra.mxu0 0.0
      %1392 = vmatprep.subr.mxu0 0.0
      %1393 = vmatpush1.msra.mxu0 0.0
      %1394 = vmatprep.subr.mxu0 0.0
      %1395 = vmatpush1.msra.mxu0 0.0
      %1396 = vmatprep.subr.mxu0 0.0
      %1397 = vmatpush1.msra.mxu0 0.0
      %1398 = vmatprep.subr.mxu0 0.0
      %1399 = vmatpush1.msra.mxu0 0.0
      %1400 = vmatprep.subr.mxu0 0.0
      %1401 = vmatpush1.msra.mxu0 0.0
      %1402 = vmatprep.subr.mxu0 0.0
      %1403 = vmatpush1.msra.mxu0 0.0
      %1404 = vmatprep.subr.mxu0 0.0
      %1405 = vmatpush1.msra.mxu0 0.0
      %1406 = vmatprep.subr.mxu0 0.0
      %1407 = vmatpush1.msra.mxu0 0.0
      %1408 = vmatprep.subr.mxu0 0.0
      %1409 = vmatpush1.msra.mxu0 0.0
      %1410 = vmatprep.subr.mxu0 0.0
      %1411 = vmatpush1.msra.mxu0 0.0
      %1412 = vmatprep.subr.mxu0 0.0
      %1413 = vmatpush1.msra.mxu0 0.0
      %1414 = vmatprep.subr.mxu0 0.0
      %1415 = vmatpush1.msra.mxu0 0.0
      %1416 = vmatprep.subr.mxu0 0.0
      %1417 = vmatpush1.msra.mxu0 0.0
      %1418 = vmatprep.subr.mxu0 0.0
      %1419 = vmatpush1.msra.mxu0 0.0
      %1420 = vmatprep.subr.mxu0 0.0
      %1421 = vmatpush1.msra.mxu0 0.0
      %1422 = vmatprep.subr.mxu0 0.0
      %1423 = vmatpush1.msra.mxu0 0.0
      %1424 = vmatprep.subr.mxu0 0.0
      %1425 = vmatpush1.msra.mxu0 0.0
      %1426 = vmatprep.subr.mxu0 0.0
      %1427 = vmatpush1.msra.mxu0 0.0
      %1428 = vmatprep.subr.mxu0 0.0
      %1429 = vmatpush1.msra.mxu0 0.0
      %1430 = vmatprep.subr.mxu0 0.0
      %1431 = vmatpush1.msra.mxu0 0.0
      %1432 = vmatprep.subr.mxu0 0.0
      %1433 = vmatpush1.msra.mxu0 0.0
      %1434 = vmatprep.subr.mxu0 0.0
      %1435 = vmatpush1.msra.mxu0 0.0
      %1436 = vmatprep.subr.mxu0 0.0
      %1437 = vmatpush1.msra.mxu0 0.0
      %1438 = vmatprep.subr.mxu0 0.0
      %1439 = vmatpush1.msra.mxu0 0.0
      %1440 = vmatprep.subr.mxu0 0.0
      %1441 = vmatpush1.msra.mxu0 0.0
      %1442 = vmatprep.subr.mxu0 0.0
      %1443 = vmatpush1.msra.mxu0 0.0
      %1444 = vmatprep.subr.mxu0 0.0
      %1445 = vmatpush1.msra.mxu0 0.0
      %1446 = vmatprep.mubr.f32.mxu0 0.0
      %1447 = vmatmul.mubr.f32.gmra.mrb[0].mxu0 %v1377
      %v1448 = vpop.f32.mrb[0].mxu0
      %v1449 = vadd.f32 %v1374, %v1448
      %v1450 = vpop.f32.mrb[0].mxu0
      %1451 = vmatprep.mubr.f32.mxu0 0.0
      %1452 = vmatmul.mubr.f32.gmra.mrb[0].mxu0 %v1380
      %v1453 = vpop.f32.mrb[0].mxu0
      %v1454 = vadd.f32 %v1374, %v1453
      %v1455 = vpop.f32.mrb[0].mxu0
      %1456 = vdwg.mxu0
      %1457 = vmax.xlane.f32.xlu0 %v1449
      %v1458 = vpop.xlane.xlu0 %1457
      %1459 = vmax.xlane.f32.xlu0 %v1454
      %v1460 = vpop.xlane.xlu0 %1459
      %v1461 = vsub.f32 %v1449, %v1458
      %v1462 = vsub.f32 %v1454, %v1460
      %v1463 = vmul.f32 %v1461, 1.442695
      %v1464 = vpow.pop %v1463
      %v1465 = vmul.f32 %v1462, 1.442695
      %v1466 = vpow.pop %v1465
      %1467 = vadd.xlane.f32.xlu0 %v1464
      %v1468 = vpop.xlane.xlu0 %1467
      %1469 = vadd.xlane.f32.xlu0 %v1466
      %v1470 = vpop.xlane.xlu0 %1469
      %v1471 = vlog2.pop %v1468
      %v1472 = vmul.f32 %v1471, 0.6931472
      %v1473 = vlog2.pop %v1470
      %v1474 = vmul.f32 %v1473, 0.6931472
      %v1475 = vadd.f32 %v1458, %v1472
      %v1476 = vadd.f32 %v1460, %v1474
      %v1477 = vsub.f32 %v1449, %v1475
      %v1478 = vsub.f32 %v1454, %v1476
      %1479 = vst [vmem:[%s251] sm:$0xff] %v1477
      %1480 = vst [vmem:[%s251 + $0x8] sm:$0xff] %v1478
      %p1481 = scmp.lt.s32.totalorder %s17, 2
      %s1482 = scalar_select %p1481, %s17, 2
      %s1483 = smul.addr %s1482, 2
      %s1484 = smul.addr %s1483, 8
      %s1485 = scalar_lea.vmem %s6, %s1484
      // Predicated region
      $region45: #{forward.1} parent=43 // pred_check
        %p1486 = pneg %p166
      $region46: #{forward.1} parent=43 // pred_check_branch
        %1488 = sbr.rel (%p1486) target = $region48
      $region47: #{forward.1} parent=43 // pred_region
        _
      $region48: #{forward.1} parent=43 // pred_fallthru
        _
    $region44: #{forward.1} parent=5 // pred_fallthru
      _
    %p1489 = scmp.le.s32.totalorder 2, %s12
    // Predicated region
    $region49: #{forward.1} parent=5 // pred_check
      %p1490 = pneg %p1489
    $region50: #{forward.1} parent=5 // pred_check_branch
      %1492 = sbr.rel (%p1490) target = $region52
    $region51: #{forward.1} parent=5 // pred_region
      %s1493 = ssub.s32 %s12, 2
      // Predicated region
      $region53: #{forward.1} parent=51 // pred_check
        %p1494 = pneg %p172
      $region54: #{forward.1} parent=51 // pred_check_branch
        %1496 = sbr.rel (%p1494) target = $region56
      $region55: #{forward.1} parent=51 // pred_region
        %p1497 = scmp.lt.s32.totalorder %s18, 2
        %s1498 = scalar_select %p1497, %s18, 2
        %s1499 = smul.addr %s1498, 2
        %s1500 = smul.addr %s1499, 8
        %s1501 = scalar_lea.vmem %s6, %s1500
      $region56: #{forward.1} parent=51 // pred_fallthru
        _
    $region52: #{forward.1} parent=5 // pred_fallthru
      _
  $region6: #{forward.1} parent=0 // loop_footer
    %s16 = sadd.s32 1, %s12
  $region7: #{forward.1} parent=0 // loop_footer_branch
    %11 = sbr.rel target = $region3
  $region8: #{forward.1} parent=0 // loop_exit
    _

</llo_original>
